<compile_context>
chip_gen: v6e
topology: v6e:2x2x1
jax: 0.10.0
libtpu: 0.0.40
codegen_flags: <defaults>
</compile_context>

<pallas_src>
import functools

import jax
import jax.numpy as jnp
import numpy as np
from jax.experimental import pallas as pl
from jax.experimental.pallas import tpu as pltpu

MATMUL_DTYPE = jnp.float32  # flip to jnp.bfloat16 on v6e/v7x (relax tolerance)


# ----------------------------- Pallas kernel --------------------------------
def _make_encoder_lstm_kernel(T, B, E, H, L):
    """Grid-less kernel: full multi-layer LSTM, wavefront-scheduled.

    Ref layout (in order):
      x_ref        : (T*B, E)        embedded inputs, time-major rows
      [W_l, b_l]*L : (D_in_l + H, 4H), (1, 4H)   stacked [W_ih^T ; W_hh^T], fused bias
      out_ref      : (B, 2*L*H)      lane-dense [h_0 | .. | h_{L-1} | c_0 | .. | c_{L-1}]
    """

    def kernel(x_ref, *rest):
        w_refs = rest[:2 * L]
        out_ref = rest[2 * L]

        # ---- load weights once (off the serial path) ----------------------
        w_stack = [w_refs[2 * l][...] for l in range(L)]      # (D_in_l + H, 4H)
        biases = [w_refs[2 * l + 1][...] for l in range(L)]   # (1, 4H)

        # ---- layer 0: ONE batched input projection over all T steps -------
        wih0 = w_stack[0][:E, :]                               # (E, 4H)
        whh0 = w_stack[0][E:, :]                               # (H, 4H)
        x_all = x_ref[...].astype(MATMUL_DTYPE)                # (T*B, E)
        g0_all = jnp.dot(x_all, wih0,
                         preferred_element_type=jnp.float32) + biases[0]
        g0 = [g0_all[t * B:(t + 1) * B, :] for t in range(T)]  # T x (B, 4H), static slices

        # ---- LSTM cell: full-vreg nonlinearities (2 EUP pushes + tanh(c)) --
        def cell(gates, c_prev):
            sig = jax.nn.sigmoid(gates)          # one pass over the whole (B, 4H) vreg
            tnh = jnp.tanh(gates)                # one pass over the whole (B, 4H) vreg
            i_g = sig[:, 0 * H:1 * H]
            f_g = sig[:, 1 * H:2 * H]
            g_g = tnh[:, 2 * H:3 * H]
            o_g = sig[:, 3 * H:4 * H]
            c_new = f_g * c_prev + i_g * g_g
            h_new = o_g * jnp.tanh(c_new)
            return h_new, c_new

        # ---- wavefront (diagonal) schedule over (layer, time) --------------
        h = [jnp.zeros((B, H), jnp.float32) for _ in range(L)]
        c = [jnp.zeros((B, H), jnp.float32) for _ in range(L)]
        h_out = [[None] * T for _ in range(L)]   # activations carried as VALUES

        for s in range(T + L - 1):
            for l in range(L):
                t = s - l
                if t < 0 or t >= T:
                    continue
                if l == 0:
                    # Input projection already done; only h @ W_hh^T is serial.
                    gates = g0[t] + jnp.dot(h[0].astype(MATMUL_DTYPE), whh0,
                                            preferred_element_type=jnp.float32)
                else:
                    # Fused x-proj + h-proj: one MXU push per serial step.
                    lhs = jnp.concatenate([h_out[l - 1][t], h[l]],
                                          axis=1).astype(MATMUL_DTYPE)
                    gates = jnp.dot(lhs, w_stack[l],
                                    preferred_element_type=jnp.float32) + biases[l]
                h[l], c[l] = cell(gates, c[l])
                if l + 1 < L:
                    h_out[l][t] = h[l]

        # ---- lane-dense writeback: one unmasked (B, 2*L*H) store -----------
        out_ref[...] = jnp.concatenate(h + c, axis=1)

        # TODO(synk): nn.LSTM inter-layer dropout (training mode) not applied;
        # this matches inference semantics (dropout is identity in eval()).

    return kernel


def encoder_lstm_pallas(x_tbe, layer_weights):
    """Run the full multi-layer LSTM over time-major x_tbe: (T, B, E).

    layer_weights: list of (W_stack (D_in + H, 4H), bias (1, 4H)) per layer,
    where W_stack = [W_ih^T ; W_hh^T] stacked along rows.
    Returns (hn, cn), each (num_layers, B, H).
    """
    T, B, E = x_tbe.shape
    L = len(layer_weights)
    four_h = layer_weights[0][1].shape[1]
    H = four_h // 4

    kernel = _make_encoder_lstm_kernel(T, B, E, H, L)

    vmem_spec = pl.BlockSpec(memory_space=pltpu.MemorySpace.VMEM)
    flat_weights = []
    in_specs = [vmem_spec]
    for (w_stack, bias) in layer_weights:
        flat_weights += [w_stack, bias]
        in_specs += [vmem_spec, vmem_spec]

    # Flatten time into the sublane axis at the JAX level (free) so the kernel
    # can issue ONE batched (T*B, E) @ (E, 4H) input projection for layer 0.
    x_flat = x_tbe.reshape(T * B, E)

    out = pl.pallas_call(
        kernel,
        out_shape=jax.ShapeDtypeStruct((B, 2 * L * H), jnp.float32),
        in_specs=in_specs,
        out_specs=vmem_spec,
    )(x_flat, *flat_weights)

    # (B, 2*L*H) -> (2L, B, H) -> split into hn / cn.
    tmp = jnp.transpose(out.reshape(B, 2 * L, H), (1, 0, 2))
    return tmp[:L], tmp[L:]


# ------------------------------- Encoder -------------------------------------
def init_encoder_params(key, vocab_size, embedding_size, hidden_size, num_layer):
    """Deterministic synthetic parameters (same shapes as nn.Embedding/nn.LSTM)."""
    params = {}
    key, k_emb = jax.random.split(key)
    params["embedding"] = 0.1 * jax.random.normal(
        k_emb, (vocab_size, embedding_size), jnp.float32)

    layers = []
    for layer in range(num_layer):
        in_size = embedding_size if layer == 0 else hidden_size
        key, k1, k2, k3, k4 = jax.random.split(key, 5)
        s = 1.0 / np.sqrt(hidden_size)
        layers.append(dict(
            w_ih=s * jax.random.normal(k1, (4 * hidden_size, in_size), jnp.float32),
            w_hh=s * jax.random.normal(k2, (4 * hidden_size, hidden_size), jnp.float32),
            b_ih=s * jax.random.normal(k3, (4 * hidden_size,), jnp.float32),
            b_hh=s * jax.random.normal(k4, (4 * hidden_size,), jnp.float32),
        ))
    params["lstm"] = layers
    return params


def prepare_encoder_params(params):
    """One-time host-side weight prep:
       stack [W_ih^T ; W_hh^T] per layer, fold the two biases, pre-cast dtype."""
    prepped = {"embedding": params["embedding"], "lstm": []}
    for lp in params["lstm"]:
        four_h = lp["w_ih"].shape[0]
        w_stack = jnp.concatenate(
            [jnp.asarray(lp["w_ih"].T), jnp.asarray(lp["w_hh"].T)],
            axis=0).astype(MATMUL_DTYPE)                              # (D_in+H, 4H)
        bias = (lp["b_ih"] + lp["b_hh"]).reshape(1, four_h).astype(jnp.float32)
        prepped["lstm"].append((w_stack, bias))
    return prepped


def encoder_forward(prepped_params, X):
    """X: int32 (B, T) token ids. Returns (hn, cn), each (num_layers, B, H)."""
    # Embedding lookup (glue): (B, T) -> (B, T, E), then time-major (T, B, E).
    embed = jnp.take(prepped_params["embedding"], X, axis=0)
    x = jnp.transpose(embed, (1, 0, 2))
    return encoder_lstm_pallas(x, prepped_params["lstm"])


# -------------------- Pure-JAX reference (lax.scan) ---------------------------
def _lstm_layer_ref(x_tbe, w_ih, w_hh, b_ih, b_hh):
    T, B, E = x_tbe.shape
    H = w_hh.shape[1]

    def step(carry, x_t):
        h, c = carry
        gates = x_t @ w_ih.T + h @ w_hh.T + b_ih + b_hh
        i = jax.nn.sigmoid(gates[:, 0 * H:1 * H])
        f = jax.nn.sigmoid(gates[:, 1 * H:2 * H])
        g = jnp.tanh(gates[:, 2 * H:3 * H])
        o = jax.nn.sigmoid(gates[:, 3 * H:4 * H])
        c = f * c + i * g
        h = o * jnp.tanh(c)
        return (h, c), h

    h0 = jnp.zeros((B, H), jnp.float32)
    c0 = jnp.zeros((B, H), jnp.float32)
    (hn, cn), y = jax.lax.scan(step, (h0, c0), x_tbe)
    return y, hn, cn


def encoder_forward_ref(params, X):
    embed = jnp.take(params["embedding"], X, axis=0)
    x = jnp.transpose(embed, (1, 0, 2))
    hns, cns = [], []
    for lp in params["lstm"]:
        y, hn, cn = _lstm_layer_ref(x, lp["w_ih"], lp["w_hh"], lp["b_ih"], lp["b_hh"])
        x = y
        hns.append(hn)
        cns.append(cn)
    return jnp.stack(hns, axis=0), jnp.stack(cns, axis=0)


if __name__ == "__main__":
    # Small shapes consistent with the module.
    VOCAB = 50
    EMBED = 32
    HIDDEN = 32
    NUM_LAYERS = 2
    P_DROPOUT = 0.1   # unused (inference semantics)
    B, T = 2, 8

    key = jax.random.PRNGKey(0)
    key, k_tok = jax.random.split(key)
    X = jax.random.randint(k_tok, (B, T), 0, VOCAB, dtype=jnp.int32)

    params = init_encoder_params(key, VOCAB, EMBED, HIDDEN, NUM_LAYERS)
    prepped = prepare_encoder_params(params)

    hn, cn = jax.jit(functools.partial(encoder_forward, prepped))(X)
    jax.block_until_ready((hn, cn))

    hn_ref, cn_ref = encoder_forward_ref(params, X)
    np.testing.assert_allclose(np.asarray(hn), np.asarray(hn_ref), rtol=1e-5, atol=1e-5)
    np.testing.assert_allclose(np.asarray(cn), np.asarray(cn_ref), rtol=1e-5, atol=1e-5)

    assert hn.shape == (NUM_LAYERS, B, HIDDEN) and cn.shape == (NUM_LAYERS, B, HIDDEN)
    print("KERNEL_OK")
</pallas_src>

<mosaic_0001>
module attributes {stable_mosaic.version = 11 : i64} {
  func.func @kernel(%arg0: memref<16x32xf32, #tpu.memory_space<vmem>>, %arg1: memref<64x128xf32, #tpu.memory_space<vmem>>, %arg2: memref<1x128xf32, #tpu.memory_space<vmem>>, %arg3: memref<64x128xf32, #tpu.memory_space<vmem>>, %arg4: memref<1x128xf32, #tpu.memory_space<vmem>>, %arg5: memref<2x128xf32, #tpu.memory_space<vmem>>) attributes {dimension_semantics = [], scalar_prefetch = 0 : i64, scratch_operands = 0 : i64, tpu.core_type = #tpu.core_type<tc>} {
    %c0 = arith.constant 0 : index
    %c0_0 = arith.constant 0 : index
    %0 = vector.load %arg1[%c0, %c0_0] : memref<64x128xf32, #tpu.memory_space<vmem>>, vector<64x128xf32>
    %c0_1 = arith.constant 0 : index
    %c0_2 = arith.constant 0 : index
    %1 = vector.load %arg3[%c0_1, %c0_2] : memref<64x128xf32, #tpu.memory_space<vmem>>, vector<64x128xf32>
    %c0_3 = arith.constant 0 : index
    %c0_4 = arith.constant 0 : index
    %2 = vector.load %arg2[%c0_3, %c0_4] : memref<1x128xf32, #tpu.memory_space<vmem>>, vector<1x128xf32>
    %c0_5 = arith.constant 0 : index
    %c0_6 = arith.constant 0 : index
    %3 = vector.load %arg4[%c0_5, %c0_6] : memref<1x128xf32, #tpu.memory_space<vmem>>, vector<1x128xf32>
    %4 = vector.extract_strided_slice %0 {offsets = [0, 0], sizes = [32, 128], strides = [1, 1]} : vector<64x128xf32> to vector<32x128xf32>
    %5 = vector.extract_strided_slice %0 {offsets = [32, 0], sizes = [32, 128], strides = [1, 1]} : vector<64x128xf32> to vector<32x128xf32>
    %c0_7 = arith.constant 0 : index
    %c0_8 = arith.constant 0 : index
    %6 = vector.load %arg0[%c0_7, %c0_8] : memref<16x32xf32, #tpu.memory_space<vmem>>, vector<16x32xf32>
    %cst = arith.constant dense<0.000000e+00> : vector<16x128xf32>
    %7 = tpu.matmul %6, %4, %cst {dimension_numbers = #tpu.dot_dimension_numbers<[1], [0], [0], [1], [0, 0, 1, 1], [], []>} : vector<16x32xf32>, vector<32x128xf32>, vector<16x128xf32> -> vector<16x128xf32>
    %8 = vector.broadcast %2 : vector<1x128xf32> to vector<16x128xf32>
    %9 = arith.addf %7, %8 : vector<16x128xf32>
    %10 = vector.extract_strided_slice %9 {offsets = [0, 0], sizes = [2, 128], strides = [1, 1]} : vector<16x128xf32> to vector<2x128xf32>
    %11 = vector.extract_strided_slice %9 {offsets = [2, 0], sizes = [2, 128], strides = [1, 1]} : vector<16x128xf32> to vector<2x128xf32>
    %12 = vector.extract_strided_slice %9 {offsets = [4, 0], sizes = [2, 128], strides = [1, 1]} : vector<16x128xf32> to vector<2x128xf32>
    %13 = vector.extract_strided_slice %9 {offsets = [6, 0], sizes = [2, 128], strides = [1, 1]} : vector<16x128xf32> to vector<2x128xf32>
    %14 = vector.extract_strided_slice %9 {offsets = [8, 0], sizes = [2, 128], strides = [1, 1]} : vector<16x128xf32> to vector<2x128xf32>
    %15 = vector.extract_strided_slice %9 {offsets = [10, 0], sizes = [2, 128], strides = [1, 1]} : vector<16x128xf32> to vector<2x128xf32>
    %16 = vector.extract_strided_slice %9 {offsets = [12, 0], sizes = [2, 128], strides = [1, 1]} : vector<16x128xf32> to vector<2x128xf32>
    %17 = vector.extract_strided_slice %9 {offsets = [14, 0], sizes = [2, 128], strides = [1, 1]} : vector<16x128xf32> to vector<2x128xf32>
    %cst_9 = arith.constant 0.000000e+00 : f32
    %18 = vector.broadcast %cst_9 : f32 to vector<2x32xf32>
    %cst_10 = arith.constant 0.000000e+00 : f32
    %19 = vector.broadcast %cst_10 : f32 to vector<2x32xf32>
    %cst_11 = arith.constant 0.000000e+00 : f32
    %20 = vector.broadcast %cst_11 : f32 to vector<2x32xf32>
    %cst_12 = arith.constant 0.000000e+00 : f32
    %21 = vector.broadcast %cst_12 : f32 to vector<2x32xf32>
    %cst_13 = arith.constant dense<0.000000e+00> : vector<2x128xf32>
    %22 = tpu.matmul %18, %5, %cst_13 {dimension_numbers = #tpu.dot_dimension_numbers<[1], [0], [0], [1], [0, 0, 1, 1], [], []>} : vector<2x32xf32>, vector<32x128xf32>, vector<2x128xf32> -> vector<2x128xf32>
    %23 = arith.addf %10, %22 : vector<2x128xf32>
    %24 = arith.negf %23 : vector<2x128xf32>
    %25 = math.exp %24 : vector<2x128xf32>
    %cst_14 = arith.constant 1.000000e+00 : f32
    %26 = vector.broadcast %cst_14 : f32 to vector<2x128xf32>
    %27 = arith.addf %26, %25 : vector<2x128xf32>
    %28 = arith.divf %26, %27 : vector<2x128xf32>
    %29 = math.tanh %23 : vector<2x128xf32>
    %30 = vector.extract_strided_slice %28 {offsets = [0, 0], sizes = [2, 32], strides = [1, 1]} : vector<2x128xf32> to vector<2x32xf32>
    %31 = vector.extract_strided_slice %28 {offsets = [0, 32], sizes = [2, 32], strides = [1, 1]} : vector<2x128xf32> to vector<2x32xf32>
    %32 = vector.extract_strided_slice %29 {offsets = [0, 64], sizes = [2, 32], strides = [1, 1]} : vector<2x128xf32> to vector<2x32xf32>
    %33 = vector.extract_strided_slice %28 {offsets = [0, 96], sizes = [2, 32], strides = [1, 1]} : vector<2x128xf32> to vector<2x32xf32>
    %34 = arith.mulf %31, %20 : vector<2x32xf32>
    %35 = arith.mulf %30, %32 : vector<2x32xf32>
    %36 = arith.addf %34, %35 : vector<2x32xf32>
    %37 = math.tanh %36 : vector<2x32xf32>
    %38 = arith.mulf %33, %37 : vector<2x32xf32>
    %cst_15 = arith.constant dense<0.000000e+00> : vector<2x128xf32>
    %39 = tpu.matmul %38, %5, %cst_15 {dimension_numbers = #tpu.dot_dimension_numbers<[1], [0], [0], [1], [0, 0, 1, 1], [], []>} : vector<2x32xf32>, vector<32x128xf32>, vector<2x128xf32> -> vector<2x128xf32>
    %40 = arith.addf %11, %39 : vector<2x128xf32>
    %41 = arith.negf %40 : vector<2x128xf32>
    %42 = math.exp %41 : vector<2x128xf32>
    %cst_16 = arith.constant 1.000000e+00 : f32
    %43 = vector.broadcast %cst_16 : f32 to vector<2x128xf32>
    %44 = arith.addf %43, %42 : vector<2x128xf32>
    %45 = arith.divf %43, %44 : vector<2x128xf32>
    %46 = math.tanh %40 : vector<2x128xf32>
    %47 = vector.extract_strided_slice %45 {offsets = [0, 0], sizes = [2, 32], strides = [1, 1]} : vector<2x128xf32> to vector<2x32xf32>
    %48 = vector.extract_strided_slice %45 {offsets = [0, 32], sizes = [2, 32], strides = [1, 1]} : vector<2x128xf32> to vector<2x32xf32>
    %49 = vector.extract_strided_slice %46 {offsets = [0, 64], sizes = [2, 32], strides = [1, 1]} : vector<2x128xf32> to vector<2x32xf32>
    %50 = vector.extract_strided_slice %45 {offsets = [0, 96], sizes = [2, 32], strides = [1, 1]} : vector<2x128xf32> to vector<2x32xf32>
    %51 = arith.mulf %48, %36 : vector<2x32xf32>
    %52 = arith.mulf %47, %49 : vector<2x32xf32>
    %53 = arith.addf %51, %52 : vector<2x32xf32>
    %54 = math.tanh %53 : vector<2x32xf32>
    %55 = arith.mulf %50, %54 : vector<2x32xf32>
    %56 = tpu.concatenate %38, %19 in 1 : vector<2x32xf32>, vector<2x32xf32> -> vector<2x64xf32>
    %cst_17 = arith.constant dense<0.000000e+00> : vector<2x128xf32>
    %57 = tpu.matmul %56, %1, %cst_17 {dimension_numbers = #tpu.dot_dimension_numbers<[1], [0], [0], [1], [0, 0, 1, 1], [], []>} : vector<2x64xf32>, vector<64x128xf32>, vector<2x128xf32> -> vector<2x128xf32>
    %58 = vector.broadcast %3 : vector<1x128xf32> to vector<2x128xf32>
    %59 = arith.addf %57, %58 : vector<2x128xf32>
    %60 = arith.negf %59 : vector<2x128xf32>
    %61 = math.exp %60 : vector<2x128xf32>
    %cst_18 = arith.constant 1.000000e+00 : f32
    %62 = vector.broadcast %cst_18 : f32 to vector<2x128xf32>
    %63 = arith.addf %62, %61 : vector<2x128xf32>
    %64 = arith.divf %62, %63 : vector<2x128xf32>
    %65 = math.tanh %59 : vector<2x128xf32>
    %66 = vector.extract_strided_slice %64 {offsets = [0, 0], sizes = [2, 32], strides = [1, 1]} : vector<2x128xf32> to vector<2x32xf32>
    %67 = vector.extract_strided_slice %64 {offsets = [0, 32], sizes = [2, 32], strides = [1, 1]} : vector<2x128xf32> to vector<2x32xf32>
    %68 = vector.extract_strided_slice %65 {offsets = [0, 64], sizes = [2, 32], strides = [1, 1]} : vector<2x128xf32> to vector<2x32xf32>
    %69 = vector.extract_strided_slice %64 {offsets = [0, 96], sizes = [2, 32], strides = [1, 1]} : vector<2x128xf32> to vector<2x32xf32>
    %70 = arith.mulf %67, %21 : vector<2x32xf32>
    %71 = arith.mulf %66, %68 : vector<2x32xf32>
    %72 = arith.addf %70, %71 : vector<2x32xf32>
    %73 = math.tanh %72 : vector<2x32xf32>
    %74 = arith.mulf %69, %73 : vector<2x32xf32>
    %cst_19 = arith.constant dense<0.000000e+00> : vector<2x128xf32>
    %75 = tpu.matmul %55, %5, %cst_19 {dimension_numbers = #tpu.dot_dimension_numbers<[1], [0], [0], [1], [0, 0, 1, 1], [], []>} : vector<2x32xf32>, vector<32x128xf32>, vector<2x128xf32> -> vector<2x128xf32>
    %76 = arith.addf %12, %75 : vector<2x128xf32>
    %77 = arith.negf %76 : vector<2x128xf32>
    %78 = math.exp %77 : vector<2x128xf32>
    %cst_20 = arith.constant 1.000000e+00 : f32
    %79 = vector.broadcast %cst_20 : f32 to vector<2x128xf32>
    %80 = arith.addf %79, %78 : vector<2x128xf32>
    %81 = arith.divf %79, %80 : vector<2x128xf32>
    %82 = math.tanh %76 : vector<2x128xf32>
    %83 = vector.extract_strided_slice %81 {offsets = [0, 0], sizes = [2, 32], strides = [1, 1]} : vector<2x128xf32> to vector<2x32xf32>
    %84 = vector.extract_strided_slice %81 {offsets = [0, 32], sizes = [2, 32], strides = [1, 1]} : vector<2x128xf32> to vector<2x32xf32>
    %85 = vector.extract_strided_slice %82 {offsets = [0, 64], sizes = [2, 32], strides = [1, 1]} : vector<2x128xf32> to vector<2x32xf32>
    %86 = vector.extract_strided_slice %81 {offsets = [0, 96], sizes = [2, 32], strides = [1, 1]} : vector<2x128xf32> to vector<2x32xf32>
    %87 = arith.mulf %84, %53 : vector<2x32xf32>
    %88 = arith.mulf %83, %85 : vector<2x32xf32>
    %89 = arith.addf %87, %88 : vector<2x32xf32>
    %90 = math.tanh %89 : vector<2x32xf32>
    %91 = arith.mulf %86, %90 : vector<2x32xf32>
    %92 = tpu.concatenate %55, %74 in 1 : vector<2x32xf32>, vector<2x32xf32> -> vector<2x64xf32>
    %cst_21 = arith.constant dense<0.000000e+00> : vector<2x128xf32>
    %93 = tpu.matmul %92, %1, %cst_21 {dimension_numbers = #tpu.dot_dimension_numbers<[1], [0], [0], [1], [0, 0, 1, 1], [], []>} : vector<2x64xf32>, vector<64x128xf32>, vector<2x128xf32> -> vector<2x128xf32>
    %94 = vector.broadcast %3 : vector<1x128xf32> to vector<2x128xf32>
    %95 = arith.addf %93, %94 : vector<2x128xf32>
    %96 = arith.negf %95 : vector<2x128xf32>
    %97 = math.exp %96 : vector<2x128xf32>
    %cst_22 = arith.constant 1.000000e+00 : f32
    %98 = vector.broadcast %cst_22 : f32 to vector<2x128xf32>
    %99 = arith.addf %98, %97 : vector<2x128xf32>
    %100 = arith.divf %98, %99 : vector<2x128xf32>
    %101 = math.tanh %95 : vector<2x128xf32>
    %102 = vector.extract_strided_slice %100 {offsets = [0, 0], sizes = [2, 32], strides = [1, 1]} : vector<2x128xf32> to vector<2x32xf32>
    %103 = vector.extract_strided_slice %100 {offsets = [0, 32], sizes = [2, 32], strides = [1, 1]} : vector<2x128xf32> to vector<2x32xf32>
    %104 = vector.extract_strided_slice %101 {offsets = [0, 64], sizes = [2, 32], strides = [1, 1]} : vector<2x128xf32> to vector<2x32xf32>
    %105 = vector.extract_strided_slice %100 {offsets = [0, 96], sizes = [2, 32], strides = [1, 1]} : vector<2x128xf32> to vector<2x32xf32>
    %106 = arith.mulf %103, %72 : vector<2x32xf32>
    %107 = arith.mulf %102, %104 : vector<2x32xf32>
    %108 = arith.addf %106, %107 : vector<2x32xf32>
    %109 = math.tanh %108 : vector<2x32xf32>
    %110 = arith.mulf %105, %109 : vector<2x32xf32>
    %cst_23 = arith.constant dense<0.000000e+00> : vector<2x128xf32>
    %111 = tpu.matmul %91, %5, %cst_23 {dimension_numbers = #tpu.dot_dimension_numbers<[1], [0], [0], [1], [0, 0, 1, 1], [], []>} : vector<2x32xf32>, vector<32x128xf32>, vector<2x128xf32> -> vector<2x128xf32>
    %112 = arith.addf %13, %111 : vector<2x128xf32>
    %113 = arith.negf %112 : vector<2x128xf32>
    %114 = math.exp %113 : vector<2x128xf32>
    %cst_24 = arith.constant 1.000000e+00 : f32
    %115 = vector.broadcast %cst_24 : f32 to vector<2x128xf32>
    %116 = arith.addf %115, %114 : vector<2x128xf32>
    %117 = arith.divf %115, %116 : vector<2x128xf32>
    %118 = math.tanh %112 : vector<2x128xf32>
    %119 = vector.extract_strided_slice %117 {offsets = [0, 0], sizes = [2, 32], strides = [1, 1]} : vector<2x128xf32> to vector<2x32xf32>
    %120 = vector.extract_strided_slice %117 {offsets = [0, 32], sizes = [2, 32], strides = [1, 1]} : vector<2x128xf32> to vector<2x32xf32>
    %121 = vector.extract_strided_slice %118 {offsets = [0, 64], sizes = [2, 32], strides = [1, 1]} : vector<2x128xf32> to vector<2x32xf32>
    %122 = vector.extract_strided_slice %117 {offsets = [0, 96], sizes = [2, 32], strides = [1, 1]} : vector<2x128xf32> to vector<2x32xf32>
    %123 = arith.mulf %120, %89 : vector<2x32xf32>
    %124 = arith.mulf %119, %121 : vector<2x32xf32>
    %125 = arith.addf %123, %124 : vector<2x32xf32>
    %126 = math.tanh %125 : vector<2x32xf32>
    %127 = arith.mulf %122, %126 : vector<2x32xf32>
    %128 = tpu.concatenate %91, %110 in 1 : vector<2x32xf32>, vector<2x32xf32> -> vector<2x64xf32>
    %cst_25 = arith.constant dense<0.000000e+00> : vector<2x128xf32>
    %129 = tpu.matmul %128, %1, %cst_25 {dimension_numbers = #tpu.dot_dimension_numbers<[1], [0], [0], [1], [0, 0, 1, 1], [], []>} : vector<2x64xf32>, vector<64x128xf32>, vector<2x128xf32> -> vector<2x128xf32>
    %130 = vector.broadcast %3 : vector<1x128xf32> to vector<2x128xf32>
    %131 = arith.addf %129, %130 : vector<2x128xf32>
    %132 = arith.negf %131 : vector<2x128xf32>
    %133 = math.exp %132 : vector<2x128xf32>
    %cst_26 = arith.constant 1.000000e+00 : f32
    %134 = vector.broadcast %cst_26 : f32 to vector<2x128xf32>
    %135 = arith.addf %134, %133 : vector<2x128xf32>
    %136 = arith.divf %134, %135 : vector<2x128xf32>
    %137 = math.tanh %131 : vector<2x128xf32>
    %138 = vector.extract_strided_slice %136 {offsets = [0, 0], sizes = [2, 32], strides = [1, 1]} : vector<2x128xf32> to vector<2x32xf32>
    %139 = vector.extract_strided_slice %136 {offsets = [0, 32], sizes = [2, 32], strides = [1, 1]} : vector<2x128xf32> to vector<2x32xf32>
    %140 = vector.extract_strided_slice %137 {offsets = [0, 64], sizes = [2, 32], strides = [1, 1]} : vector<2x128xf32> to vector<2x32xf32>
    %141 = vector.extract_strided_slice %136 {offsets = [0, 96], sizes = [2, 32], strides = [1, 1]} : vector<2x128xf32> to vector<2x32xf32>
    %142 = arith.mulf %139, %108 : vector<2x32xf32>
    %143 = arith.mulf %138, %140 : vector<2x32xf32>
    %144 = arith.addf %142, %143 : vector<2x32xf32>
    %145 = math.tanh %144 : vector<2x32xf32>
    %146 = arith.mulf %141, %145 : vector<2x32xf32>
    %cst_27 = arith.constant dense<0.000000e+00> : vector<2x128xf32>
    %147 = tpu.matmul %127, %5, %cst_27 {dimension_numbers = #tpu.dot_dimension_numbers<[1], [0], [0], [1], [0, 0, 1, 1], [], []>} : vector<2x32xf32>, vector<32x128xf32>, vector<2x128xf32> -> vector<2x128xf32>
    %148 = arith.addf %14, %147 : vector<2x128xf32>
    %149 = arith.negf %148 : vector<2x128xf32>
    %150 = math.exp %149 : vector<2x128xf32>
    %cst_28 = arith.constant 1.000000e+00 : f32
    %151 = vector.broadcast %cst_28 : f32 to vector<2x128xf32>
    %152 = arith.addf %151, %150 : vector<2x128xf32>
    %153 = arith.divf %151, %152 : vector<2x128xf32>
    %154 = math.tanh %148 : vector<2x128xf32>
    %155 = vector.extract_strided_slice %153 {offsets = [0, 0], sizes = [2, 32], strides = [1, 1]} : vector<2x128xf32> to vector<2x32xf32>
    %156 = vector.extract_strided_slice %153 {offsets = [0, 32], sizes = [2, 32], strides = [1, 1]} : vector<2x128xf32> to vector<2x32xf32>
    %157 = vector.extract_strided_slice %154 {offsets = [0, 64], sizes = [2, 32], strides = [1, 1]} : vector<2x128xf32> to vector<2x32xf32>
    %158 = vector.extract_strided_slice %153 {offsets = [0, 96], sizes = [2, 32], strides = [1, 1]} : vector<2x128xf32> to vector<2x32xf32>
    %159 = arith.mulf %156, %125 : vector<2x32xf32>
    %160 = arith.mulf %155, %157 : vector<2x32xf32>
    %161 = arith.addf %159, %160 : vector<2x32xf32>
    %162 = math.tanh %161 : vector<2x32xf32>
    %163 = arith.mulf %158, %162 : vector<2x32xf32>
    %164 = tpu.concatenate %127, %146 in 1 : vector<2x32xf32>, vector<2x32xf32> -> vector<2x64xf32>
    %cst_29 = arith.constant dense<0.000000e+00> : vector<2x128xf32>
    %165 = tpu.matmul %164, %1, %cst_29 {dimension_numbers = #tpu.dot_dimension_numbers<[1], [0], [0], [1], [0, 0, 1, 1], [], []>} : vector<2x64xf32>, vector<64x128xf32>, vector<2x128xf32> -> vector<2x128xf32>
    %166 = vector.broadcast %3 : vector<1x128xf32> to vector<2x128xf32>
    %167 = arith.addf %165, %166 : vector<2x128xf32>
    %168 = arith.negf %167 : vector<2x128xf32>
    %169 = math.exp %168 : vector<2x128xf32>
    %cst_30 = arith.constant 1.000000e+00 : f32
    %170 = vector.broadcast %cst_30 : f32 to vector<2x128xf32>
    %171 = arith.addf %170, %169 : vector<2x128xf32>
    %172 = arith.divf %170, %171 : vector<2x128xf32>
    %173 = math.tanh %167 : vector<2x128xf32>
    %174 = vector.extract_strided_slice %172 {offsets = [0, 0], sizes = [2, 32], strides = [1, 1]} : vector<2x128xf32> to vector<2x32xf32>
    %175 = vector.extract_strided_slice %172 {offsets = [0, 32], sizes = [2, 32], strides = [1, 1]} : vector<2x128xf32> to vector<2x32xf32>
    %176 = vector.extract_strided_slice %173 {offsets = [0, 64], sizes = [2, 32], strides = [1, 1]} : vector<2x128xf32> to vector<2x32xf32>
    %177 = vector.extract_strided_slice %172 {offsets = [0, 96], sizes = [2, 32], strides = [1, 1]} : vector<2x128xf32> to vector<2x32xf32>
    %178 = arith.mulf %175, %144 : vector<2x32xf32>
    %179 = arith.mulf %174, %176 : vector<2x32xf32>
    %180 = arith.addf %178, %179 : vector<2x32xf32>
    %181 = math.tanh %180 : vector<2x32xf32>
    %182 = arith.mulf %177, %181 : vector<2x32xf32>
    %cst_31 = arith.constant dense<0.000000e+00> : vector<2x128xf32>
    %183 = tpu.matmul %163, %5, %cst_31 {dimension_numbers = #tpu.dot_dimension_numbers<[1], [0], [0], [1], [0, 0, 1, 1], [], []>} : vector<2x32xf32>, vector<32x128xf32>, vector<2x128xf32> -> vector<2x128xf32>
    %184 = arith.addf %15, %183 : vector<2x128xf32>
    %185 = arith.negf %184 : vector<2x128xf32>
    %186 = math.exp %185 : vector<2x128xf32>
    %cst_32 = arith.constant 1.000000e+00 : f32
    %187 = vector.broadcast %cst_32 : f32 to vector<2x128xf32>
    %188 = arith.addf %187, %186 : vector<2x128xf32>
    %189 = arith.divf %187, %188 : vector<2x128xf32>
    %190 = math.tanh %184 : vector<2x128xf32>
    %191 = vector.extract_strided_slice %189 {offsets = [0, 0], sizes = [2, 32], strides = [1, 1]} : vector<2x128xf32> to vector<2x32xf32>
    %192 = vector.extract_strided_slice %189 {offsets = [0, 32], sizes = [2, 32], strides = [1, 1]} : vector<2x128xf32> to vector<2x32xf32>
    %193 = vector.extract_strided_slice %190 {offsets = [0, 64], sizes = [2, 32], strides = [1, 1]} : vector<2x128xf32> to vector<2x32xf32>
    %194 = vector.extract_strided_slice %189 {offsets = [0, 96], sizes = [2, 32], strides = [1, 1]} : vector<2x128xf32> to vector<2x32xf32>
    %195 = arith.mulf %192, %161 : vector<2x32xf32>
    %196 = arith.mulf %191, %193 : vector<2x32xf32>
    %197 = arith.addf %195, %196 : vector<2x32xf32>
    %198 = math.tanh %197 : vector<2x32xf32>
    %199 = arith.mulf %194, %198 : vector<2x32xf32>
    %200 = tpu.concatenate %163, %182 in 1 : vector<2x32xf32>, vector<2x32xf32> -> vector<2x64xf32>
    %cst_33 = arith.constant dense<0.000000e+00> : vector<2x128xf32>
    %201 = tpu.matmul %200, %1, %cst_33 {dimension_numbers = #tpu.dot_dimension_numbers<[1], [0], [0], [1], [0, 0, 1, 1], [], []>} : vector<2x64xf32>, vector<64x128xf32>, vector<2x128xf32> -> vector<2x128xf32>
    %202 = vector.broadcast %3 : vector<1x128xf32> to vector<2x128xf32>
    %203 = arith.addf %201, %202 : vector<2x128xf32>
    %204 = arith.negf %203 : vector<2x128xf32>
    %205 = math.exp %204 : vector<2x128xf32>
    %cst_34 = arith.constant 1.000000e+00 : f32
    %206 = vector.broadcast %cst_34 : f32 to vector<2x128xf32>
    %207 = arith.addf %206, %205 : vector<2x128xf32>
    %208 = arith.divf %206, %207 : vector<2x128xf32>
    %209 = math.tanh %203 : vector<2x128xf32>
    %210 = vector.extract_strided_slice %208 {offsets = [0, 0], sizes = [2, 32], strides = [1, 1]} : vector<2x128xf32> to vector<2x32xf32>
    %211 = vector.extract_strided_slice %208 {offsets = [0, 32], sizes = [2, 32], strides = [1, 1]} : vector<2x128xf32> to vector<2x32xf32>
    %212 = vector.extract_strided_slice %209 {offsets = [0, 64], sizes = [2, 32], strides = [1, 1]} : vector<2x128xf32> to vector<2x32xf32>
    %213 = vector.extract_strided_slice %208 {offsets = [0, 96], sizes = [2, 32], strides = [1, 1]} : vector<2x128xf32> to vector<2x32xf32>
    %214 = arith.mulf %211, %180 : vector<2x32xf32>
    %215 = arith.mulf %210, %212 : vector<2x32xf32>
    %216 = arith.addf %214, %215 : vector<2x32xf32>
    %217 = math.tanh %216 : vector<2x32xf32>
    %218 = arith.mulf %213, %217 : vector<2x32xf32>
    %cst_35 = arith.constant dense<0.000000e+00> : vector<2x128xf32>
    %219 = tpu.matmul %199, %5, %cst_35 {dimension_numbers = #tpu.dot_dimension_numbers<[1], [0], [0], [1], [0, 0, 1, 1], [], []>} : vector<2x32xf32>, vector<32x128xf32>, vector<2x128xf32> -> vector<2x128xf32>
    %220 = arith.addf %16, %219 : vector<2x128xf32>
    %221 = arith.negf %220 : vector<2x128xf32>
    %222 = math.exp %221 : vector<2x128xf32>
    %cst_36 = arith.constant 1.000000e+00 : f32
    %223 = vector.broadcast %cst_36 : f32 to vector<2x128xf32>
    %224 = arith.addf %223, %222 : vector<2x128xf32>
    %225 = arith.divf %223, %224 : vector<2x128xf32>
    %226 = math.tanh %220 : vector<2x128xf32>
    %227 = vector.extract_strided_slice %225 {offsets = [0, 0], sizes = [2, 32], strides = [1, 1]} : vector<2x128xf32> to vector<2x32xf32>
    %228 = vector.extract_strided_slice %225 {offsets = [0, 32], sizes = [2, 32], strides = [1, 1]} : vector<2x128xf32> to vector<2x32xf32>
    %229 = vector.extract_strided_slice %226 {offsets = [0, 64], sizes = [2, 32], strides = [1, 1]} : vector<2x128xf32> to vector<2x32xf32>
    %230 = vector.extract_strided_slice %225 {offsets = [0, 96], sizes = [2, 32], strides = [1, 1]} : vector<2x128xf32> to vector<2x32xf32>
    %231 = arith.mulf %228, %197 : vector<2x32xf32>
    %232 = arith.mulf %227, %229 : vector<2x32xf32>
    %233 = arith.addf %231, %232 : vector<2x32xf32>
    %234 = math.tanh %233 : vector<2x32xf32>
    %235 = arith.mulf %230, %234 : vector<2x32xf32>
    %236 = tpu.concatenate %199, %218 in 1 : vector<2x32xf32>, vector<2x32xf32> -> vector<2x64xf32>
    %cst_37 = arith.constant dense<0.000000e+00> : vector<2x128xf32>
    %237 = tpu.matmul %236, %1, %cst_37 {dimension_numbers = #tpu.dot_dimension_numbers<[1], [0], [0], [1], [0, 0, 1, 1], [], []>} : vector<2x64xf32>, vector<64x128xf32>, vector<2x128xf32> -> vector<2x128xf32>
    %238 = vector.broadcast %3 : vector<1x128xf32> to vector<2x128xf32>
    %239 = arith.addf %237, %238 : vector<2x128xf32>
    %240 = arith.negf %239 : vector<2x128xf32>
    %241 = math.exp %240 : vector<2x128xf32>
    %cst_38 = arith.constant 1.000000e+00 : f32
    %242 = vector.broadcast %cst_38 : f32 to vector<2x128xf32>
    %243 = arith.addf %242, %241 : vector<2x128xf32>
    %244 = arith.divf %242, %243 : vector<2x128xf32>
    %245 = math.tanh %239 : vector<2x128xf32>
    %246 = vector.extract_strided_slice %244 {offsets = [0, 0], sizes = [2, 32], strides = [1, 1]} : vector<2x128xf32> to vector<2x32xf32>
    %247 = vector.extract_strided_slice %244 {offsets = [0, 32], sizes = [2, 32], strides = [1, 1]} : vector<2x128xf32> to vector<2x32xf32>
    %248 = vector.extract_strided_slice %245 {offsets = [0, 64], sizes = [2, 32], strides = [1, 1]} : vector<2x128xf32> to vector<2x32xf32>
    %249 = vector.extract_strided_slice %244 {offsets = [0, 96], sizes = [2, 32], strides = [1, 1]} : vector<2x128xf32> to vector<2x32xf32>
    %250 = arith.mulf %247, %216 : vector<2x32xf32>
    %251 = arith.mulf %246, %248 : vector<2x32xf32>
    %252 = arith.addf %250, %251 : vector<2x32xf32>
    %253 = math.tanh %252 : vector<2x32xf32>
    %254 = arith.mulf %249, %253 : vector<2x32xf32>
    %cst_39 = arith.constant dense<0.000000e+00> : vector<2x128xf32>
    %255 = tpu.matmul %235, %5, %cst_39 {dimension_numbers = #tpu.dot_dimension_numbers<[1], [0], [0], [1], [0, 0, 1, 1], [], []>} : vector<2x32xf32>, vector<32x128xf32>, vector<2x128xf32> -> vector<2x128xf32>
    %256 = arith.addf %17, %255 : vector<2x128xf32>
    %257 = arith.negf %256 : vector<2x128xf32>
    %258 = math.exp %257 : vector<2x128xf32>
    %cst_40 = arith.constant 1.000000e+00 : f32
    %259 = vector.broadcast %cst_40 : f32 to vector<2x128xf32>
    %260 = arith.addf %259, %258 : vector<2x128xf32>
    %261 = arith.divf %259, %260 : vector<2x128xf32>
    %262 = math.tanh %256 : vector<2x128xf32>
    %263 = vector.extract_strided_slice %261 {offsets = [0, 0], sizes = [2, 32], strides = [1, 1]} : vector<2x128xf32> to vector<2x32xf32>
    %264 = vector.extract_strided_slice %261 {offsets = [0, 32], sizes = [2, 32], strides = [1, 1]} : vector<2x128xf32> to vector<2x32xf32>
    %265 = vector.extract_strided_slice %262 {offsets = [0, 64], sizes = [2, 32], strides = [1, 1]} : vector<2x128xf32> to vector<2x32xf32>
    %266 = vector.extract_strided_slice %261 {offsets = [0, 96], sizes = [2, 32], strides = [1, 1]} : vector<2x128xf32> to vector<2x32xf32>
    %267 = arith.mulf %264, %233 : vector<2x32xf32>
    %268 = arith.mulf %263, %265 : vector<2x32xf32>
    %269 = arith.addf %267, %268 : vector<2x32xf32>
    %270 = math.tanh %269 : vector<2x32xf32>
    %271 = arith.mulf %266, %270 : vector<2x32xf32>
    %272 = tpu.concatenate %235, %254 in 1 : vector<2x32xf32>, vector<2x32xf32> -> vector<2x64xf32>
    %cst_41 = arith.constant dense<0.000000e+00> : vector<2x128xf32>
    %273 = tpu.matmul %272, %1, %cst_41 {dimension_numbers = #tpu.dot_dimension_numbers<[1], [0], [0], [1], [0, 0, 1, 1], [], []>} : vector<2x64xf32>, vector<64x128xf32>, vector<2x128xf32> -> vector<2x128xf32>
    %274 = vector.broadcast %3 : vector<1x128xf32> to vector<2x128xf32>
    %275 = arith.addf %273, %274 : vector<2x128xf32>
    %276 = arith.negf %275 : vector<2x128xf32>
    %277 = math.exp %276 : vector<2x128xf32>
    %cst_42 = arith.constant 1.000000e+00 : f32
    %278 = vector.broadcast %cst_42 : f32 to vector<2x128xf32>
    %279 = arith.addf %278, %277 : vector<2x128xf32>
    %280 = arith.divf %278, %279 : vector<2x128xf32>
    %281 = math.tanh %275 : vector<2x128xf32>
    %282 = vector.extract_strided_slice %280 {offsets = [0, 0], sizes = [2, 32], strides = [1, 1]} : vector<2x128xf32> to vector<2x32xf32>
    %283 = vector.extract_strided_slice %280 {offsets = [0, 32], sizes = [2, 32], strides = [1, 1]} : vector<2x128xf32> to vector<2x32xf32>
    %284 = vector.extract_strided_slice %281 {offsets = [0, 64], sizes = [2, 32], strides = [1, 1]} : vector<2x128xf32> to vector<2x32xf32>
    %285 = vector.extract_strided_slice %280 {offsets = [0, 96], sizes = [2, 32], strides = [1, 1]} : vector<2x128xf32> to vector<2x32xf32>
    %286 = arith.mulf %283, %252 : vector<2x32xf32>
    %287 = arith.mulf %282, %284 : vector<2x32xf32>
    %288 = arith.addf %286, %287 : vector<2x32xf32>
    %289 = math.tanh %288 : vector<2x32xf32>
    %290 = arith.mulf %285, %289 : vector<2x32xf32>
    %291 = tpu.concatenate %271, %290 in 1 : vector<2x32xf32>, vector<2x32xf32> -> vector<2x64xf32>
    %cst_43 = arith.constant dense<0.000000e+00> : vector<2x128xf32>
    %292 = tpu.matmul %291, %1, %cst_43 {dimension_numbers = #tpu.dot_dimension_numbers<[1], [0], [0], [1], [0, 0, 1, 1], [], []>} : vector<2x64xf32>, vector<64x128xf32>, vector<2x128xf32> -> vector<2x128xf32>
    %293 = vector.broadcast %3 : vector<1x128xf32> to vector<2x128xf32>
    %294 = arith.addf %292, %293 : vector<2x128xf32>
    %295 = arith.negf %294 : vector<2x128xf32>
    %296 = math.exp %295 : vector<2x128xf32>
    %cst_44 = arith.constant 1.000000e+00 : f32
    %297 = vector.broadcast %cst_44 : f32 to vector<2x128xf32>
    %298 = arith.addf %297, %296 : vector<2x128xf32>
    %299 = arith.divf %297, %298 : vector<2x128xf32>
    %300 = math.tanh %294 : vector<2x128xf32>
    %301 = vector.extract_strided_slice %299 {offsets = [0, 0], sizes = [2, 32], strides = [1, 1]} : vector<2x128xf32> to vector<2x32xf32>
    %302 = vector.extract_strided_slice %299 {offsets = [0, 32], sizes = [2, 32], strides = [1, 1]} : vector<2x128xf32> to vector<2x32xf32>
    %303 = vector.extract_strided_slice %300 {offsets = [0, 64], sizes = [2, 32], strides = [1, 1]} : vector<2x128xf32> to vector<2x32xf32>
    %304 = vector.extract_strided_slice %299 {offsets = [0, 96], sizes = [2, 32], strides = [1, 1]} : vector<2x128xf32> to vector<2x32xf32>
    %305 = arith.mulf %302, %288 : vector<2x32xf32>
    %306 = arith.mulf %301, %303 : vector<2x32xf32>
    %307 = arith.addf %305, %306 : vector<2x32xf32>
    %308 = math.tanh %307 : vector<2x32xf32>
    %309 = arith.mulf %304, %308 : vector<2x32xf32>
    %310 = tpu.concatenate %271, %309, %269, %307 in 1 : vector<2x32xf32>, vector<2x32xf32>, vector<2x32xf32>, vector<2x32xf32> -> vector<2x128xf32>
    %c0_45 = arith.constant 0 : index
    %c0_46 = arith.constant 0 : index
    %311 = vector.load %arg5[%c0_45, %c0_46] : memref<2x128xf32, #tpu.memory_space<vmem>>, vector<2x128xf32>
    tpu.vector_store %arg5[%c0_45, %c0_46], %310 {strides = array<i32>} : memref<2x128xf32, #tpu.memory_space<vmem>>, vector<2x128xf32>,
    return
  }
}

</mosaic_0001>

<llo_original>
// kernel: encoder_forward.1
$region0: #{encoder_forward.1}
  #allocation0 [shape = 'u32[]', space=smem, size = 0x4, offset = 0x4, fixed_abs, tag = 'smem constant byte address 0x4 - core index']
  #allocation1 [shape = 'u32[144,128]{1,0:T(1,128)}', space=vmem, size = 0x12000, scoped, tag = 'internal scratch']
  %s0 = inlined_call_operand.vmem [shape: f32[16,32], index: 0, kind: input, shape index: {}]
  %s1 = inlined_call_operand.vmem [shape: f32[64,128], index: 1, kind: input, shape index: {}]
  %s2 = inlined_call_operand.vmem [shape: f32[1,128], index: 2, kind: input, shape index: {}]
  %s3 = inlined_call_operand.vmem [shape: f32[64,128], index: 3, kind: input, shape index: {}]
  %s4 = inlined_call_operand.vmem [shape: f32[1,128], index: 4, kind: input, shape index: {}]
  %s5 = inlined_call_operand.vmem [shape: f32[2,128], index: 5, kind: output, shape index: {}]
  %s6 = sld [smem:[#allocation0]]
  $region30: #{encoder_forward.1} parent=0
    _
  %s8 = ssub.s32 1, %s6
  %s9 = scalar_select 0, %s8, %s6
  // Predicated region
  $region2: #{encoder_forward.1} parent=0 // pred_check
    _
  $region3: #{encoder_forward.1} parent=0 // pred_check_branch
    %11 = sbr.rel (0) target = $region5
  $region4: #{encoder_forward.1} parent=0 // pred_region
    _
  $region5: #{encoder_forward.1} parent=0 // pred_fallthru
    _
  // Predicated region
  $region6: #{encoder_forward.1} parent=0 // pred_check
    _
  $region7: #{encoder_forward.1} parent=0 // pred_check_branch
    %13 = sbr.rel (0) target = $region9
  $region8: #{encoder_forward.1} parent=0 // pred_region
    _
  $region9: #{encoder_forward.1} parent=0 // pred_fallthru
    _
  // Predicated region
  $region10: #{encoder_forward.1} parent=0 // pred_check
    _
  $region11: #{encoder_forward.1} parent=0 // pred_check_branch
    %15 = sbr.rel (0) target = $region13
  $region12: #{encoder_forward.1} parent=0 // pred_region
    _
  $region13: #{encoder_forward.1} parent=0 // pred_fallthru
    _
  // Predicated region
  $region14: #{encoder_forward.1} parent=0 // pred_check
    _
  $region15: #{encoder_forward.1} parent=0 // pred_check_branch
    %17 = sbr.rel (0) target = $region17
  $region16: #{encoder_forward.1} parent=0 // pred_region
    _
  $region17: #{encoder_forward.1} parent=0 // pred_fallthru
    _
  // Predicated region
  $region18: #{encoder_forward.1} parent=0 // pred_check
    _
  $region19: #{encoder_forward.1} parent=0 // pred_check_branch
    %19 = sbr.rel (0) target = $region21
  $region20: #{encoder_forward.1} parent=0 // pred_region
    _
  $region21: #{encoder_forward.1} parent=0 // pred_fallthru
    _
  %v20 = vld [vmem:[%s1] sm:$0xff]
  %v21 = vld [vmem:[%s1 + $0x8] sm:$0xff]
  %v22 = vld [vmem:[%s1 + $0x10] sm:$0xff]
  %v23 = vld [vmem:[%s1 + $0x18] sm:$0xff]
  %v24 = vld [vmem:[%s1 + $0x20] sm:$0xff]
  %v25 = vld [vmem:[%s1 + $0x28] sm:$0xff]
  %v26 = vld [vmem:[%s1 + $0x30] sm:$0xff]
  %v27 = vld [vmem:[%s1 + $0x38] sm:$0xff]
  %v28 = vld [vmem:[%s3] sm:$0xff]
  %v29 = vld [vmem:[%s3 + $0x8] sm:$0xff]
  %v30 = vld [vmem:[%s3 + $0x10] sm:$0xff]
  %v31 = vld [vmem:[%s3 + $0x18] sm:$0xff]
  %v32 = vld [vmem:[%s3 + $0x20] sm:$0xff]
  %v33 = vld [vmem:[%s3 + $0x28] sm:$0xff]
  %v34 = vld [vmem:[%s3 + $0x30] sm:$0xff]
  %v35 = vld [vmem:[%s3 + $0x38] sm:$0xff]
  %v36 = vld [vmem:[%s2] sm:$0x1]
  %v37 = vld [vmem:[%s4] sm:$0x1]
  %v38 = vld [vmem:[%s0] sm:$0xff]
  %v39 = vld [vmem:[%s0 + $0x8] sm:$0xff]
  %v41 = vlaneseq
  %v42 = vshrl.u32 %v41, 7
  %v43 = vsub.s32 0, %v42
  %v44 = vrot.slane %v36, %v43
  %vm46 = vcmask 261120
  %v48 = vsel %vm46, %v38, 0
  %v51 = vsel %vm46, %v39, 0
  %53 = vmatprep.subr.mxu0 0.0
  %54 = vmatpush1.msra.mxu0 0.0
  %55 = vmatprep.subr.mxu0 0.0
  %56 = vmatpush1.msra.mxu0 0.0
  %57 = vmatprep.subr.mxu0 0.0
  %58 = vmatpush1.msra.mxu0 0.0
  %59 = vmatprep.subr.mxu0 0.0
  %60 = vmatpush1.msra.mxu0 0.0
  %61 = vmatprep.subr.mxu0 0.0
  %62 = vmatpush1.msra.mxu0 0.0
  %63 = vmatprep.subr.mxu0 0.0
  %64 = vmatpush1.msra.mxu0 0.0
  %65 = vmatprep.subr.mxu0 0.0
  %66 = vmatpush1.msra.mxu0 0.0
  %67 = vmatprep.subr.mxu0 0.0
  %68 = vmatpush1.msra.mxu0 0.0
  %69 = vmatprep.subr.mxu0 0.0
  %70 = vmatpush1.msra.mxu0 0.0
  %71 = vmatprep.subr.mxu0 0.0
  %72 = vmatpush1.msra.mxu0 0.0
  %73 = vmatprep.subr.mxu0 0.0
  %74 = vmatpush1.msra.mxu0 0.0
  %75 = vmatprep.subr.mxu0 0.0
  %76 = vmatpush1.msra.mxu0 0.0
  %77 = vmatprep.subr.mxu0 0.0
  %78 = vmatpush1.msra.mxu0 %v23
  %79 = vmatprep.subr.mxu0 0.0
  %80 = vmatpush1.msra.mxu0 %v22
  %81 = vmatprep.subr.mxu0 0.0
  %82 = vmatpush1.msra.mxu0 %v21
  %83 = vmatprep.subr.mxu0 0.0
  %84 = vmatpush1.msra.mxu0 %v20
  %85 = vmatprep.subr.mxu0 0.0
  %86 = vmatpush2.msra.mxu0 0.0
  %87 = vmatprep.subr.mxu0 0.0
  %88 = vmatpush2.msra.mxu0 0.0
  %89 = vmatprep.subr.mxu0 0.0
  %90 = vmatpush2.msra.mxu0 0.0
  %91 = vmatprep.subr.mxu0 0.0
  %92 = vmatpush2.msra.mxu0 0.0
  %93 = vmatprep.subr.mxu0 0.0
  %94 = vmatpush2.msra.mxu0 0.0
  %95 = vmatprep.subr.mxu0 0.0
  %96 = vmatpush2.msra.mxu0 0.0
  %97 = vmatprep.subr.mxu0 0.0
  %98 = vmatpush2.msra.mxu0 0.0
  %99 = vmatprep.subr.mxu0 0.0
  %100 = vmatpush2.msra.mxu0 0.0
  %101 = vmatprep.subr.mxu0 0.0
  %102 = vmatpush2.msra.mxu0 0.0
  %103 = vmatprep.subr.mxu0 0.0
  %104 = vmatpush2.msra.mxu0 0.0
  %105 = vmatprep.subr.mxu0 0.0
  %106 = vmatpush2.msra.mxu0 0.0
  %107 = vmatprep.subr.mxu0 0.0
  %108 = vmatpush2.msra.mxu0 0.0
  %109 = vmatprep.subr.mxu0 0.0
  %110 = vmatpush2.msra.mxu0 0.0
  %111 = vmatprep.subr.mxu0 0.0
  %112 = vmatpush2.msra.mxu0 0.0
  %113 = vmatprep.subr.mxu0 0.0
  %114 = vmatpush2.msra.mxu0 0.0
  %115 = vmatprep.subr.mxu0 0.0
  %116 = vmatpush2.msra.mxu0 0.0
  %117 = vmatprep.mubr.f32.mxu0 0.0
  %118 = vmatmul.mubr.f32.gmra.mxu0 %v48
  %v119 = vpop.f32.mrf.mxu0
  %v120 = vadd.f32 %v44, %v119
  %v121 = vpop.f32.mrf.mxu0
  %122 = vmatprep.mubr.f32.mxu0 0.0
  %123 = vmatmul.mubr.f32.gmra.mxu0 %v51
  %v124 = vpop.f32.mrf.mxu0
  %v125 = vadd.f32 %v44, %v124
  %v126 = vpop.f32.mrf.mxu0
  %127 = vdwg.mxu0
  %v129 = vsel %vm46, 0.0, 0
  %131 = vmatprep.subr.mxu0 0.0
  %132 = vmatpush1.msra.mxu0 0.0
  %133 = vmatprep.subr.mxu0 0.0
  %134 = vmatpush1.msra.mxu0 0.0
  %135 = vmatprep.subr.mxu0 0.0
  %136 = vmatpush1.msra.mxu0 0.0
  %137 = vmatprep.subr.mxu0 0.0
  %138 = vmatpush1.msra.mxu0 0.0
  %139 = vmatprep.subr.mxu0 0.0
  %140 = vmatpush1.msra.mxu0 0.0
  %141 = vmatprep.subr.mxu0 0.0
  %142 = vmatpush1.msra.mxu0 0.0
  %143 = vmatprep.subr.mxu0 0.0
  %144 = vmatpush1.msra.mxu0 0.0
  %145 = vmatprep.subr.mxu0 0.0
  %146 = vmatpush1.msra.mxu0 0.0
  %147 = vmatprep.subr.mxu0 0.0
  %148 = vmatpush1.msra.mxu0 0.0
  %149 = vmatprep.subr.mxu0 0.0
  %150 = vmatpush1.msra.mxu0 0.0
  %151 = vmatprep.subr.mxu0 0.0
  %152 = vmatpush1.msra.mxu0 0.0
  %153 = vmatprep.subr.mxu0 0.0
  %154 = vmatpush1.msra.mxu0 0.0
  %155 = vmatprep.subr.mxu0 0.0
  %156 = vmatpush1.msra.mxu0 %v27
  %157 = vmatprep.subr.mxu0 0.0
  %158 = vmatpush1.msra.mxu0 %v26
  %159 = vmatprep.subr.mxu0 0.0
  %160 = vmatpush1.msra.mxu0 %v25
  %161 = vmatprep.subr.mxu0 0.0
  %162 = vmatpush1.msra.mxu0 %v24
  %163 = vmatprep.subr.mxu0 0.0
  %164 = vmatpush2.msra.mxu0 0.0
  %165 = vmatprep.subr.mxu0 0.0
  %166 = vmatpush2.msra.mxu0 0.0
  %167 = vmatprep.subr.mxu0 0.0
  %168 = vmatpush2.msra.mxu0 0.0
  %169 = vmatprep.subr.mxu0 0.0
  %170 = vmatpush2.msra.mxu0 0.0
  %171 = vmatprep.subr.mxu0 0.0
  %172 = vmatpush2.msra.mxu0 0.0
  %173 = vmatprep.subr.mxu0 0.0
  %174 = vmatpush2.msra.mxu0 0.0
  %175 = vmatprep.subr.mxu0 0.0
  %176 = vmatpush2.msra.mxu0 0.0
  %177 = vmatprep.subr.mxu0 0.0
  %178 = vmatpush2.msra.mxu0 0.0
  %179 = vmatprep.subr.mxu0 0.0
  %180 = vmatpush2.msra.mxu0 0.0
  %181 = vmatprep.subr.mxu0 0.0
  %182 = vmatpush2.msra.mxu0 0.0
  %183 = vmatprep.subr.mxu0 0.0
  %184 = vmatpush2.msra.mxu0 0.0
  %185 = vmatprep.subr.mxu0 0.0
  %186 = vmatpush2.msra.mxu0 0.0
  %187 = vmatprep.subr.mxu0 0.0
  %188 = vmatpush2.msra.mxu0 0.0
  %189 = vmatprep.subr.mxu0 0.0
  %190 = vmatpush2.msra.mxu0 0.0
  %191 = vmatprep.subr.mxu0 0.0
  %192 = vmatpush2.msra.mxu0 0.0
  %193 = vmatprep.subr.mxu0 0.0
  %194 = vmatpush2.msra.mxu0 0.0
  %195 = vmatprep.mubr.f32.mxu0 0.0
  %196 = vmatmul.mubr.f32.gmra.mxu0 %v129
  %v197 = vpop.f32.mrf.mxu0
  %v198 = vadd.f32 0.0, %v197
  %v199 = vpop.f32.mrf.mxu0
  %200 = vdwg.mxu0
  %v201 = vadd.f32 %v120, %v198
  %v202 = vxor.u32 %v201, 2147483648
  %v203 = vmul.f32 %v202, 1.442695
  %v204 = vpow.pop %v203
  %v205 = vadd.f32 %v204, 1.0
  %v206 = vrcp.pop %v205
  %v207 = vmul.f32 1.0, %v206
  %v208 = vtanh.pop %v201
  %v209 = vmul.f32 %v207, 0.0
  %211 = vrot.lane.b32.xlu0 %v208, 64
  %v212 = vpop.permute.xlu0 %211
  %v214 = vmul.f32 %v207, %v212
  %216 = vrot.lane.b32.xlu0 %v214, 32
  %v217 = vpop.permute.xlu0 %216
  %v219 = vadd.f32 %v209, %v217
  %v220 = vtanh.pop %v219
  %222 = vrot.lane.b32.xlu0 %v220, 64
  %v223 = vpop.permute.xlu0 %222
  %v225 = vmul.f32 %v207, %v223
  %227 = vrot.lane.b32.xlu0 %v225, 32
  %v228 = vpop.permute.xlu0 %227
  %v229 = vsel %vm46, %v228, 0
  %231 = vmatprep.subr.mxu0 0.0
  %232 = vmatpush1.msra.mxu0 0.0
  %233 = vmatprep.subr.mxu0 0.0
  %234 = vmatpush1.msra.mxu0 0.0
  %235 = vmatprep.subr.mxu0 0.0
  %236 = vmatpush1.msra.mxu0 0.0
  %237 = vmatprep.subr.mxu0 0.0
  %238 = vmatpush1.msra.mxu0 0.0
  %239 = vmatprep.subr.mxu0 0.0
  %240 = vmatpush1.msra.mxu0 0.0
  %241 = vmatprep.subr.mxu0 0.0
  %242 = vmatpush1.msra.mxu0 0.0
  %243 = vmatprep.subr.mxu0 0.0
  %244 = vmatpush1.msra.mxu0 0.0
  %245 = vmatprep.subr.mxu0 0.0
  %246 = vmatpush1.msra.mxu0 0.0
  %247 = vmatprep.subr.mxu0 0.0
  %248 = vmatpush1.msra.mxu0 0.0
  %249 = vmatprep.subr.mxu0 0.0
  %250 = vmatpush1.msra.mxu0 0.0
  %251 = vmatprep.subr.mxu0 0.0
  %252 = vmatpush1.msra.mxu0 0.0
  %253 = vmatprep.subr.mxu0 0.0
  %254 = vmatpush1.msra.mxu0 0.0
  %255 = vmatprep.subr.mxu0 0.0
  %256 = vmatpush1.msra.mxu0 %v27
  %257 = vmatprep.subr.mxu0 0.0
  %258 = vmatpush1.msra.mxu0 %v26
  %259 = vmatprep.subr.mxu0 0.0
  %260 = vmatpush1.msra.mxu0 %v25
  %261 = vmatprep.subr.mxu0 0.0
  %262 = vmatpush1.msra.mxu0 %v24
  %263 = vmatprep.subr.mxu0 0.0
  %264 = vmatpush2.msra.mxu0 0.0
  %265 = vmatprep.subr.mxu0 0.0
  %266 = vmatpush2.msra.mxu0 0.0
  %267 = vmatprep.subr.mxu0 0.0
  %268 = vmatpush2.msra.mxu0 0.0
  %269 = vmatprep.subr.mxu0 0.0
  %270 = vmatpush2.msra.mxu0 0.0
  %271 = vmatprep.subr.mxu0 0.0
  %272 = vmatpush2.msra.mxu0 0.0
  %273 = vmatprep.subr.mxu0 0.0
  %274 = vmatpush2.msra.mxu0 0.0
  %275 = vmatprep.subr.mxu0 0.0
  %276 = vmatpush2.msra.mxu0 0.0
  %277 = vmatprep.subr.mxu0 0.0
  %278 = vmatpush2.msra.mxu0 0.0
  %279 = vmatprep.subr.mxu0 0.0
  %280 = vmatpush2.msra.mxu0 0.0
  %281 = vmatprep.subr.mxu0 0.0
  %282 = vmatpush2.msra.mxu0 0.0
  %283 = vmatprep.subr.mxu0 0.0
  %284 = vmatpush2.msra.mxu0 0.0
  %285 = vmatprep.subr.mxu0 0.0
  %286 = vmatpush2.msra.mxu0 0.0
  %287 = vmatprep.subr.mxu0 0.0
  %288 = vmatpush2.msra.mxu0 0.0
  %289 = vmatprep.subr.mxu0 0.0
  %290 = vmatpush2.msra.mxu0 0.0
  %291 = vmatprep.subr.mxu0 0.0
  %292 = vmatpush2.msra.mxu0 0.0
  %293 = vmatprep.subr.mxu0 0.0
  %294 = vmatpush2.msra.mxu0 0.0
  %295 = vmatprep.mubr.f32.mxu0 0.0
  %296 = vmatmul.mubr.f32.gmra.mxu0 %v229
  %v297 = vpop.f32.mrf.mxu0
  %v298 = vadd.f32 0.0, %v297
  %v299 = vpop.f32.mrf.mxu0
  %300 = vdwg.mxu0
  %v302 = vrot.slane %v298, 6
  %v304 = vadd.f32 %v120, %v302
  %v305 = vxor.u32 %v304, 2147483648
  %v306 = vmul.f32 %v305, 1.442695
  %v307 = vpow.pop %v306
  %v308 = vadd.f32 %v307, 1.0
  %v309 = vrcp.pop %v308
  %v310 = vmul.f32 1.0, %v309
  %v311 = vtanh.pop %v304
  %v313 = vrot.slane %v219, 6
  %v315 = vmul.f32 %v310, %v313
  %317 = vrot.lane.b32.xlu0 %v311, 64
  %v318 = vpop.permute.xlu0 %317
  %v320 = vmul.f32 %v310, %v318
  %322 = vrot.lane.b32.xlu0 %v320, 32
  %v323 = vpop.permute.xlu0 %322
  %v325 = vadd.f32 %v315, %v323
  %v326 = vtanh.pop %v325
  %328 = vrot.lane.b32.xlu0 %v326, 64
  %v329 = vpop.permute.xlu0 %328
  %v331 = vmul.f32 %v310, %v329
  %v333 = vsel %vm46, %v228, 0.0
  %v335 = vlaneseq
  %v336 = vshrl.u32 %v335, 7
  %v337 = vsub.s32 0, %v336
  %v338 = vrot.slane %v37, %v337
  %vm340 = vcmask 523264
  %v342 = vsel %vm340, %v333, 0
  %344 = vmatprep.subr.mxu0 0.0
  %345 = vmatpush1.msra.mxu0 0.0
  %346 = vmatprep.subr.mxu0 0.0
  %347 = vmatpush1.msra.mxu0 0.0
  %348 = vmatprep.subr.mxu0 0.0
  %349 = vmatpush1.msra.mxu0 0.0
  %350 = vmatprep.subr.mxu0 0.0
  %351 = vmatpush1.msra.mxu0 0.0
  %352 = vmatprep.subr.mxu0 0.0
  %353 = vmatpush1.msra.mxu0 0.0
  %354 = vmatprep.subr.mxu0 0.0
  %355 = vmatpush1.msra.mxu0 0.0
  %356 = vmatprep.subr.mxu0 0.0
  %357 = vmatpush1.msra.mxu0 0.0
  %358 = vmatprep.subr.mxu0 0.0
  %359 = vmatpush1.msra.mxu0 0.0
  %360 = vmatprep.subr.mxu0 0.0
  %361 = vmatpush1.msra.mxu0 %v35
  %362 = vmatprep.subr.mxu0 0.0
  %363 = vmatpush1.msra.mxu0 %v34
  %364 = vmatprep.subr.mxu0 0.0
  %365 = vmatpush1.msra.mxu0 %v33
  %366 = vmatprep.subr.mxu0 0.0
  %367 = vmatpush1.msra.mxu0 %v32
  %368 = vmatprep.subr.mxu0 0.0
  %369 = vmatpush1.msra.mxu0 %v31
  %370 = vmatprep.subr.mxu0 0.0
  %371 = vmatpush1.msra.mxu0 %v30
  %372 = vmatprep.subr.mxu0 0.0
  %373 = vmatpush1.msra.mxu0 %v29
  %374 = vmatprep.subr.mxu0 0.0
  %375 = vmatpush1.msra.mxu0 %v28
  %376 = vmatprep.subr.mxu0 0.0
  %377 = vmatpush2.msra.mxu0 0.0
  %378 = vmatprep.subr.mxu0 0.0
  %379 = vmatpush2.msra.mxu0 0.0
  %380 = vmatprep.subr.mxu0 0.0
  %381 = vmatpush2.msra.mxu0 0.0
  %382 = vmatprep.subr.mxu0 0.0
  %383 = vmatpush2.msra.mxu0 0.0
  %384 = vmatprep.subr.mxu0 0.0
  %385 = vmatpush2.msra.mxu0 0.0
  %386 = vmatprep.subr.mxu0 0.0
  %387 = vmatpush2.msra.mxu0 0.0
  %388 = vmatprep.subr.mxu0 0.0
  %389 = vmatpush2.msra.mxu0 0.0
  %390 = vmatprep.subr.mxu0 0.0
  %391 = vmatpush2.msra.mxu0 0.0
  %392 = vmatprep.subr.mxu0 0.0
  %393 = vmatpush2.msra.mxu0 0.0
  %394 = vmatprep.subr.mxu0 0.0
  %395 = vmatpush2.msra.mxu0 0.0
  %396 = vmatprep.subr.mxu0 0.0
  %397 = vmatpush2.msra.mxu0 0.0
  %398 = vmatprep.subr.mxu0 0.0
  %399 = vmatpush2.msra.mxu0 0.0
  %400 = vmatprep.subr.mxu0 0.0
  %401 = vmatpush2.msra.mxu0 0.0
  %402 = vmatprep.subr.mxu0 0.0
  %403 = vmatpush2.msra.mxu0 0.0
  %404 = vmatprep.subr.mxu0 0.0
  %405 = vmatpush2.msra.mxu0 0.0
  %406 = vmatprep.subr.mxu0 0.0
  %407 = vmatpush2.msra.mxu0 0.0
  %408 = vmatprep.mubr.f32.mxu0 0.0
  %409 = vmatmul.mubr.f32.gmra.mxu0 %v342
  %v410 = vpop.f32.mrf.mxu0
  %v411 = vadd.f32 %v338, %v410
  %v412 = vpop.f32.mrf.mxu0
  %413 = vdwg.mxu0
  %v414 = vxor.u32 %v411, 2147483648
  %v415 = vmul.f32 %v414, 1.442695
  %v416 = vpow.pop %v415
  %v417 = vadd.f32 %v416, 1.0
  %v418 = vrcp.pop %v417
  %v419 = vmul.f32 1.0, %v418
  %v420 = vtanh.pop %v411
  %v421 = vmul.f32 %v419, 0.0
  %423 = vrot.lane.b32.xlu0 %v420, 64
  %v424 = vpop.permute.xlu0 %423
  %v426 = vmul.f32 %v419, %v424
  %428 = vrot.lane.b32.xlu0 %v426, 32
  %v429 = vpop.permute.xlu0 %428
  %v431 = vadd.f32 %v421, %v429
  %v432 = vtanh.pop %v431
  %434 = vrot.lane.b32.xlu0 %v432, 64
  %v435 = vpop.permute.xlu0 %434
  %v437 = vmul.f32 %v419, %v435
  %v439 = vrot.slane %v331, 2
  %440 = vrot.lane.b32.xlu0 %v439, 32
  %v441 = vpop.permute.xlu0 %440
  %v442 = vsel %vm46, %v441, 0
  %444 = vmatprep.subr.mxu0 0.0
  %445 = vmatpush1.msra.mxu0 0.0
  %446 = vmatprep.subr.mxu0 0.0
  %447 = vmatpush1.msra.mxu0 0.0
  %448 = vmatprep.subr.mxu0 0.0
  %449 = vmatpush1.msra.mxu0 0.0
  %450 = vmatprep.subr.mxu0 0.0
  %451 = vmatpush1.msra.mxu0 0.0
  %452 = vmatprep.subr.mxu0 0.0
  %453 = vmatpush1.msra.mxu0 0.0
  %454 = vmatprep.subr.mxu0 0.0
  %455 = vmatpush1.msra.mxu0 0.0
  %456 = vmatprep.subr.mxu0 0.0
  %457 = vmatpush1.msra.mxu0 0.0
  %458 = vmatprep.subr.mxu0 0.0
  %459 = vmatpush1.msra.mxu0 0.0
  %460 = vmatprep.subr.mxu0 0.0
  %461 = vmatpush1.msra.mxu0 0.0
  %462 = vmatprep.subr.mxu0 0.0
  %463 = vmatpush1.msra.mxu0 0.0
  %464 = vmatprep.subr.mxu0 0.0
  %465 = vmatpush1.msra.mxu0 0.0
  %466 = vmatprep.subr.mxu0 0.0
  %467 = vmatpush1.msra.mxu0 0.0
  %468 = vmatprep.subr.mxu0 0.0
  %469 = vmatpush1.msra.mxu0 %v27
  %470 = vmatprep.subr.mxu0 0.0
  %471 = vmatpush1.msra.mxu0 %v26
  %472 = vmatprep.subr.mxu0 0.0
  %473 = vmatpush1.msra.mxu0 %v25
  %474 = vmatprep.subr.mxu0 0.0
  %475 = vmatpush1.msra.mxu0 %v24
  %476 = vmatprep.subr.mxu0 0.0
  %477 = vmatpush2.msra.mxu0 0.0
  %478 = vmatprep.subr.mxu0 0.0
  %479 = vmatpush2.msra.mxu0 0.0
  %480 = vmatprep.subr.mxu0 0.0
  %481 = vmatpush2.msra.mxu0 0.0
  %482 = vmatprep.subr.mxu0 0.0
  %483 = vmatpush2.msra.mxu0 0.0
  %484 = vmatprep.subr.mxu0 0.0
  %485 = vmatpush2.msra.mxu0 0.0
  %486 = vmatprep.subr.mxu0 0.0
  %487 = vmatpush2.msra.mxu0 0.0
  %488 = vmatprep.subr.mxu0 0.0
  %489 = vmatpush2.msra.mxu0 0.0
  %490 = vmatprep.subr.mxu0 0.0
  %491 = vmatpush2.msra.mxu0 0.0
  %492 = vmatprep.subr.mxu0 0.0
  %493 = vmatpush2.msra.mxu0 0.0
  %494 = vmatprep.subr.mxu0 0.0
  %495 = vmatpush2.msra.mxu0 0.0
  %496 = vmatprep.subr.mxu0 0.0
  %497 = vmatpush2.msra.mxu0 0.0
  %498 = vmatprep.subr.mxu0 0.0
  %499 = vmatpush2.msra.mxu0 0.0
  %500 = vmatprep.subr.mxu0 0.0
  %501 = vmatpush2.msra.mxu0 0.0
  %502 = vmatprep.subr.mxu0 0.0
  %503 = vmatpush2.msra.mxu0 0.0
  %504 = vmatprep.subr.mxu0 0.0
  %505 = vmatpush2.msra.mxu0 0.0
  %506 = vmatprep.subr.mxu0 0.0
  %507 = vmatpush2.msra.mxu0 0.0
  %508 = vmatprep.mubr.f32.mxu0 0.0
  %509 = vmatmul.mubr.f32.gmra.mxu0 %v442
  %v510 = vpop.f32.mrf.mxu0
  %v511 = vadd.f32 0.0, %v510
  %v512 = vpop.f32.mrf.mxu0
  %513 = vdwg.mxu0
  %v515 = vrot.slane %v511, 4
  %v517 = vadd.f32 %v120, %v515
  %v518 = vxor.u32 %v517, 2147483648
  %v519 = vmul.f32 %v518, 1.442695
  %v520 = vpow.pop %v519
  %v521 = vadd.f32 %v520, 1.0
  %v522 = vrcp.pop %v521
  %v523 = vmul.f32 1.0, %v522
  %v524 = vtanh.pop %v517
  %v526 = vrot.slane %v325, 6
  %v528 = vmul.f32 %v523, %v526
  %530 = vrot.lane.b32.xlu0 %v524, 64
  %v531 = vpop.permute.xlu0 %530
  %v533 = vmul.f32 %v523, %v531
  %535 = vrot.lane.b32.xlu0 %v533, 32
  %v536 = vpop.permute.xlu0 %535
  %v538 = vadd.f32 %v528, %v536
  %v539 = vtanh.pop %v538
  %541 = vrot.lane.b32.xlu0 %v539, 64
  %v542 = vpop.permute.xlu0 %541
  %v544 = vmul.f32 %v523, %v542
  %545 = vrot.lane.b32.xlu0 %v331, 32
  %v546 = vpop.permute.xlu0 %545
  %v549 = vrot.slane %v437, 6
  %550 = vrot.lane.b32.xlu0 %v549, 64
  %v551 = vpop.permute.xlu0 %550
  %v553 = vsel %vm46, %v546, %v551
  %v555 = vrot.slane %v553, 2
  %v556 = vsel %vm340, %v555, 0
  %558 = vmatprep.subr.mxu0 0.0
  %559 = vmatpush1.msra.mxu0 0.0
  %560 = vmatprep.subr.mxu0 0.0
  %561 = vmatpush1.msra.mxu0 0.0
  %562 = vmatprep.subr.mxu0 0.0
  %563 = vmatpush1.msra.mxu0 0.0
  %564 = vmatprep.subr.mxu0 0.0
  %565 = vmatpush1.msra.mxu0 0.0
  %566 = vmatprep.subr.mxu0 0.0
  %567 = vmatpush1.msra.mxu0 0.0
  %568 = vmatprep.subr.mxu0 0.0
  %569 = vmatpush1.msra.mxu0 0.0
  %570 = vmatprep.subr.mxu0 0.0
  %571 = vmatpush1.msra.mxu0 0.0
  %572 = vmatprep.subr.mxu0 0.0
  %573 = vmatpush1.msra.mxu0 0.0
  %574 = vmatprep.subr.mxu0 0.0
  %575 = vmatpush1.msra.mxu0 %v35
  %576 = vmatprep.subr.mxu0 0.0
  %577 = vmatpush1.msra.mxu0 %v34
  %578 = vmatprep.subr.mxu0 0.0
  %579 = vmatpush1.msra.mxu0 %v33
  %580 = vmatprep.subr.mxu0 0.0
  %581 = vmatpush1.msra.mxu0 %v32
  %582 = vmatprep.subr.mxu0 0.0
  %583 = vmatpush1.msra.mxu0 %v31
  %584 = vmatprep.subr.mxu0 0.0
  %585 = vmatpush1.msra.mxu0 %v30
  %586 = vmatprep.subr.mxu0 0.0
  %587 = vmatpush1.msra.mxu0 %v29
  %588 = vmatprep.subr.mxu0 0.0
  %589 = vmatpush1.msra.mxu0 %v28
  %590 = vmatprep.subr.mxu0 0.0
  %591 = vmatpush2.msra.mxu0 0.0
  %592 = vmatprep.subr.mxu0 0.0
  %593 = vmatpush2.msra.mxu0 0.0
  %594 = vmatprep.subr.mxu0 0.0
  %595 = vmatpush2.msra.mxu0 0.0
  %596 = vmatprep.subr.mxu0 0.0
  %597 = vmatpush2.msra.mxu0 0.0
  %598 = vmatprep.subr.mxu0 0.0
  %599 = vmatpush2.msra.mxu0 0.0
  %600 = vmatprep.subr.mxu0 0.0
  %601 = vmatpush2.msra.mxu0 0.0
  %602 = vmatprep.subr.mxu0 0.0
  %603 = vmatpush2.msra.mxu0 0.0
  %604 = vmatprep.subr.mxu0 0.0
  %605 = vmatpush2.msra.mxu0 0.0
  %606 = vmatprep.subr.mxu0 0.0
  %607 = vmatpush2.msra.mxu0 0.0
  %608 = vmatprep.subr.mxu0 0.0
  %609 = vmatpush2.msra.mxu0 0.0
  %610 = vmatprep.subr.mxu0 0.0
  %611 = vmatpush2.msra.mxu0 0.0
  %612 = vmatprep.subr.mxu0 0.0
  %613 = vmatpush2.msra.mxu0 0.0
  %614 = vmatprep.subr.mxu0 0.0
  %615 = vmatpush2.msra.mxu0 0.0
  %616 = vmatprep.subr.mxu0 0.0
  %617 = vmatpush2.msra.mxu0 0.0
  %618 = vmatprep.subr.mxu0 0.0
  %619 = vmatpush2.msra.mxu0 0.0
  %620 = vmatprep.subr.mxu0 0.0
  %621 = vmatpush2.msra.mxu0 0.0
  %622 = vmatprep.mubr.f32.mxu0 0.0
  %623 = vmatmul.mubr.f32.gmra.mxu0 %v556
  %v624 = vpop.f32.mrf.mxu0
  %v625 = vadd.f32 %v338, %v624
  %v626 = vpop.f32.mrf.mxu0
  %627 = vdwg.mxu0
  %v628 = vxor.u32 %v625, 2147483648
  %v629 = vmul.f32 %v628, 1.442695
  %v630 = vpow.pop %v629
  %v631 = vadd.f32 %v630, 1.0
  %v632 = vrcp.pop %v631
  %v633 = vmul.f32 1.0, %v632
  %v634 = vtanh.pop %v625
  %v635 = vmul.f32 %v633, %v431
  %637 = vrot.lane.b32.xlu0 %v634, 64
  %v638 = vpop.permute.xlu0 %637
  %v640 = vmul.f32 %v633, %v638
  %642 = vrot.lane.b32.xlu0 %v640, 32
  %v643 = vpop.permute.xlu0 %642
  %v645 = vadd.f32 %v635, %v643
  %v646 = vtanh.pop %v645
  %648 = vrot.lane.b32.xlu0 %v646, 64
  %v649 = vpop.permute.xlu0 %648
  %v651 = vmul.f32 %v633, %v649
  %v653 = vrot.slane %v544, 4
  %654 = vrot.lane.b32.xlu0 %v653, 32
  %v655 = vpop.permute.xlu0 %654
  %v656 = vsel %vm46, %v655, 0
  %658 = vmatprep.subr.mxu0 0.0
  %659 = vmatpush1.msra.mxu0 0.0
  %660 = vmatprep.subr.mxu0 0.0
  %661 = vmatpush1.msra.mxu0 0.0
  %662 = vmatprep.subr.mxu0 0.0
  %663 = vmatpush1.msra.mxu0 0.0
  %664 = vmatprep.subr.mxu0 0.0
  %665 = vmatpush1.msra.mxu0 0.0
  %666 = vmatprep.subr.mxu0 0.0
  %667 = vmatpush1.msra.mxu0 0.0
  %668 = vmatprep.subr.mxu0 0.0
  %669 = vmatpush1.msra.mxu0 0.0
  %670 = vmatprep.subr.mxu0 0.0
  %671 = vmatpush1.msra.mxu0 0.0
  %672 = vmatprep.subr.mxu0 0.0
  %673 = vmatpush1.msra.mxu0 0.0
  %674 = vmatprep.subr.mxu0 0.0
  %675 = vmatpush1.msra.mxu0 0.0
  %676 = vmatprep.subr.mxu0 0.0
  %677 = vmatpush1.msra.mxu0 0.0
  %678 = vmatprep.subr.mxu0 0.0
  %679 = vmatpush1.msra.mxu0 0.0
  %680 = vmatprep.subr.mxu0 0.0
  %681 = vmatpush1.msra.mxu0 0.0
  %682 = vmatprep.subr.mxu0 0.0
  %683 = vmatpush1.msra.mxu0 %v27
  %684 = vmatprep.subr.mxu0 0.0
  %685 = vmatpush1.msra.mxu0 %v26
  %686 = vmatprep.subr.mxu0 0.0
  %687 = vmatpush1.msra.mxu0 %v25
  %688 = vmatprep.subr.mxu0 0.0
  %689 = vmatpush1.msra.mxu0 %v24
  %690 = vmatprep.subr.mxu0 0.0
  %691 = vmatpush2.msra.mxu0 0.0
  %692 = vmatprep.subr.mxu0 0.0
  %693 = vmatpush2.msra.mxu0 0.0
  %694 = vmatprep.subr.mxu0 0.0
  %695 = vmatpush2.msra.mxu0 0.0
  %696 = vmatprep.subr.mxu0 0.0
  %697 = vmatpush2.msra.mxu0 0.0
  %698 = vmatprep.subr.mxu0 0.0
  %699 = vmatpush2.msra.mxu0 0.0
  %700 = vmatprep.subr.mxu0 0.0
  %701 = vmatpush2.msra.mxu0 0.0
  %702 = vmatprep.subr.mxu0 0.0
  %703 = vmatpush2.msra.mxu0 0.0
  %704 = vmatprep.subr.mxu0 0.0
  %705 = vmatpush2.msra.mxu0 0.0
  %706 = vmatprep.subr.mxu0 0.0
  %707 = vmatpush2.msra.mxu0 0.0
  %708 = vmatprep.subr.mxu0 0.0
  %709 = vmatpush2.msra.mxu0 0.0
  %710 = vmatprep.subr.mxu0 0.0
  %711 = vmatpush2.msra.mxu0 0.0
  %712 = vmatprep.subr.mxu0 0.0
  %713 = vmatpush2.msra.mxu0 0.0
  %714 = vmatprep.subr.mxu0 0.0
  %715 = vmatpush2.msra.mxu0 0.0
  %716 = vmatprep.subr.mxu0 0.0
  %717 = vmatpush2.msra.mxu0 0.0
  %718 = vmatprep.subr.mxu0 0.0
  %719 = vmatpush2.msra.mxu0 0.0
  %720 = vmatprep.subr.mxu0 0.0
  %721 = vmatpush2.msra.mxu0 0.0
  %722 = vmatprep.mubr.f32.mxu0 0.0
  %723 = vmatmul.mubr.f32.gmra.mxu0 %v656
  %v724 = vpop.f32.mrf.mxu0
  %v725 = vadd.f32 0.0, %v724
  %v726 = vpop.f32.mrf.mxu0
  %727 = vdwg.mxu0
  %v729 = vrot.slane %v725, 2
  %v731 = vadd.f32 %v120, %v729
  %v732 = vxor.u32 %v731, 2147483648
  %v733 = vmul.f32 %v732, 1.442695
  %v734 = vpow.pop %v733
  %v735 = vadd.f32 %v734, 1.0
  %v736 = vrcp.pop %v735
  %v737 = vmul.f32 1.0, %v736
  %v738 = vtanh.pop %v731
  %v740 = vrot.slane %v538, 6
  %v742 = vmul.f32 %v737, %v740
  %744 = vrot.lane.b32.xlu0 %v738, 64
  %v745 = vpop.permute.xlu0 %744
  %v747 = vmul.f32 %v737, %v745
  %749 = vrot.lane.b32.xlu0 %v747, 32
  %v750 = vpop.permute.xlu0 %749
  %v752 = vadd.f32 %v742, %v750
  %v753 = vtanh.pop %v752
  %755 = vrot.lane.b32.xlu0 %v753, 64
  %v756 = vpop.permute.xlu0 %755
  %v758 = vmul.f32 %v737, %v756
  %759 = vrot.lane.b32.xlu0 %v544, 32
  %v760 = vpop.permute.xlu0 %759
  %v763 = vrot.slane %v651, 4
  %764 = vrot.lane.b32.xlu0 %v763, 64
  %v765 = vpop.permute.xlu0 %764
  %v767 = vsel %vm46, %v760, %v765
  %v769 = vrot.slane %v767, 4
  %v770 = vsel %vm340, %v769, 0
  %772 = vmatprep.subr.mxu0 0.0
  %773 = vmatpush1.msra.mxu0 0.0
  %774 = vmatprep.subr.mxu0 0.0
  %775 = vmatpush1.msra.mxu0 0.0
  %776 = vmatprep.subr.mxu0 0.0
  %777 = vmatpush1.msra.mxu0 0.0
  %778 = vmatprep.subr.mxu0 0.0
  %779 = vmatpush1.msra.mxu0 0.0
  %780 = vmatprep.subr.mxu0 0.0
  %781 = vmatpush1.msra.mxu0 0.0
  %782 = vmatprep.subr.mxu0 0.0
  %783 = vmatpush1.msra.mxu0 0.0
  %784 = vmatprep.subr.mxu0 0.0
  %785 = vmatpush1.msra.mxu0 0.0
  %786 = vmatprep.subr.mxu0 0.0
  %787 = vmatpush1.msra.mxu0 0.0
  %788 = vmatprep.subr.mxu0 0.0
  %789 = vmatpush1.msra.mxu0 %v35
  %790 = vmatprep.subr.mxu0 0.0
  %791 = vmatpush1.msra.mxu0 %v34
  %792 = vmatprep.subr.mxu0 0.0
  %793 = vmatpush1.msra.mxu0 %v33
  %794 = vmatprep.subr.mxu0 0.0
  %795 = vmatpush1.msra.mxu0 %v32
  %796 = vmatprep.subr.mxu0 0.0
  %797 = vmatpush1.msra.mxu0 %v31
  %798 = vmatprep.subr.mxu0 0.0
  %799 = vmatpush1.msra.mxu0 %v30
  %800 = vmatprep.subr.mxu0 0.0
  %801 = vmatpush1.msra.mxu0 %v29
  %802 = vmatprep.subr.mxu0 0.0
  %803 = vmatpush1.msra.mxu0 %v28
  %804 = vmatprep.subr.mxu0 0.0
  %805 = vmatpush2.msra.mxu0 0.0
  %806 = vmatprep.subr.mxu0 0.0
  %807 = vmatpush2.msra.mxu0 0.0
  %808 = vmatprep.subr.mxu0 0.0
  %809 = vmatpush2.msra.mxu0 0.0
  %810 = vmatprep.subr.mxu0 0.0
  %811 = vmatpush2.msra.mxu0 0.0
  %812 = vmatprep.subr.mxu0 0.0
  %813 = vmatpush2.msra.mxu0 0.0
  %814 = vmatprep.subr.mxu0 0.0
  %815 = vmatpush2.msra.mxu0 0.0
  %816 = vmatprep.subr.mxu0 0.0
  %817 = vmatpush2.msra.mxu0 0.0
  %818 = vmatprep.subr.mxu0 0.0
  %819 = vmatpush2.msra.mxu0 0.0
  %820 = vmatprep.subr.mxu0 0.0
  %821 = vmatpush2.msra.mxu0 0.0
  %822 = vmatprep.subr.mxu0 0.0
  %823 = vmatpush2.msra.mxu0 0.0
  %824 = vmatprep.subr.mxu0 0.0
  %825 = vmatpush2.msra.mxu0 0.0
  %826 = vmatprep.subr.mxu0 0.0
  %827 = vmatpush2.msra.mxu0 0.0
  %828 = vmatprep.subr.mxu0 0.0
  %829 = vmatpush2.msra.mxu0 0.0
  %830 = vmatprep.subr.mxu0 0.0
  %831 = vmatpush2.msra.mxu0 0.0
  %832 = vmatprep.subr.mxu0 0.0
  %833 = vmatpush2.msra.mxu0 0.0
  %834 = vmatprep.subr.mxu0 0.0
  %835 = vmatpush2.msra.mxu0 0.0
  %836 = vmatprep.mubr.f32.mxu0 0.0
  %837 = vmatmul.mubr.f32.gmra.mxu0 %v770
  %v838 = vpop.f32.mrf.mxu0
  %v839 = vadd.f32 %v338, %v838
  %v840 = vpop.f32.mrf.mxu0
  %841 = vdwg.mxu0
  %v842 = vxor.u32 %v839, 2147483648
  %v843 = vmul.f32 %v842, 1.442695
  %v844 = vpow.pop %v843
  %v845 = vadd.f32 %v844, 1.0
  %v846 = vrcp.pop %v845
  %v847 = vmul.f32 1.0, %v846
  %v848 = vtanh.pop %v839
  %v849 = vmul.f32 %v847, %v645
  %851 = vrot.lane.b32.xlu0 %v848, 64
  %v852 = vpop.permute.xlu0 %851
  %v854 = vmul.f32 %v847, %v852
  %856 = vrot.lane.b32.xlu0 %v854, 32
  %v857 = vpop.permute.xlu0 %856
  %v859 = vadd.f32 %v849, %v857
  %v860 = vtanh.pop %v859
  %862 = vrot.lane.b32.xlu0 %v860, 64
  %v863 = vpop.permute.xlu0 %862
  %v865 = vmul.f32 %v847, %v863
  %v867 = vrot.slane %v758, 6
  %868 = vrot.lane.b32.xlu0 %v867, 32
  %v869 = vpop.permute.xlu0 %868
  %v870 = vsel %vm46, %v869, 0
  %872 = vmatprep.subr.mxu0 0.0
  %873 = vmatpush1.msra.mxu0 0.0
  %874 = vmatprep.subr.mxu0 0.0
  %875 = vmatpush1.msra.mxu0 0.0
  %876 = vmatprep.subr.mxu0 0.0
  %877 = vmatpush1.msra.mxu0 0.0
  %878 = vmatprep.subr.mxu0 0.0
  %879 = vmatpush1.msra.mxu0 0.0
  %880 = vmatprep.subr.mxu0 0.0
  %881 = vmatpush1.msra.mxu0 0.0
  %882 = vmatprep.subr.mxu0 0.0
  %883 = vmatpush1.msra.mxu0 0.0
  %884 = vmatprep.subr.mxu0 0.0
  %885 = vmatpush1.msra.mxu0 0.0
  %886 = vmatprep.subr.mxu0 0.0
  %887 = vmatpush1.msra.mxu0 0.0
  %888 = vmatprep.subr.mxu0 0.0
  %889 = vmatpush1.msra.mxu0 0.0
  %890 = vmatprep.subr.mxu0 0.0
  %891 = vmatpush1.msra.mxu0 0.0
  %892 = vmatprep.subr.mxu0 0.0
  %893 = vmatpush1.msra.mxu0 0.0
  %894 = vmatprep.subr.mxu0 0.0
  %895 = vmatpush1.msra.mxu0 0.0
  %896 = vmatprep.subr.mxu0 0.0
  %897 = vmatpush1.msra.mxu0 %v27
  %898 = vmatprep.subr.mxu0 0.0
  %899 = vmatpush1.msra.mxu0 %v26
  %900 = vmatprep.subr.mxu0 0.0
  %901 = vmatpush1.msra.mxu0 %v25
  %902 = vmatprep.subr.mxu0 0.0
  %903 = vmatpush1.msra.mxu0 %v24
  %904 = vmatprep.subr.mxu0 0.0
  %905 = vmatpush2.msra.mxu0 0.0
  %906 = vmatprep.subr.mxu0 0.0
  %907 = vmatpush2.msra.mxu0 0.0
  %908 = vmatprep.subr.mxu0 0.0
  %909 = vmatpush2.msra.mxu0 0.0
  %910 = vmatprep.subr.mxu0 0.0
  %911 = vmatpush2.msra.mxu0 0.0
  %912 = vmatprep.subr.mxu0 0.0
  %913 = vmatpush2.msra.mxu0 0.0
  %914 = vmatprep.subr.mxu0 0.0
  %915 = vmatpush2.msra.mxu0 0.0
  %916 = vmatprep.subr.mxu0 0.0
  %917 = vmatpush2.msra.mxu0 0.0
  %918 = vmatprep.subr.mxu0 0.0
  %919 = vmatpush2.msra.mxu0 0.0
  %920 = vmatprep.subr.mxu0 0.0
  %921 = vmatpush2.msra.mxu0 0.0
  %922 = vmatprep.subr.mxu0 0.0
  %923 = vmatpush2.msra.mxu0 0.0
  %924 = vmatprep.subr.mxu0 0.0
  %925 = vmatpush2.msra.mxu0 0.0
  %926 = vmatprep.subr.mxu0 0.0
  %927 = vmatpush2.msra.mxu0 0.0
  %928 = vmatprep.subr.mxu0 0.0
  %929 = vmatpush2.msra.mxu0 0.0
  %930 = vmatprep.subr.mxu0 0.0
  %931 = vmatpush2.msra.mxu0 0.0
  %932 = vmatprep.subr.mxu0 0.0
  %933 = vmatpush2.msra.mxu0 0.0
  %934 = vmatprep.subr.mxu0 0.0
  %935 = vmatpush2.msra.mxu0 0.0
  %936 = vmatprep.mubr.f32.mxu0 0.0
  %937 = vmatmul.mubr.f32.gmra.mxu0 %v870
  %v938 = vpop.f32.mrf.mxu0
  %v939 = vadd.f32 0.0, %v938
  %v940 = vpop.f32.mrf.mxu0
  %941 = vdwg.mxu0
  %v942 = vadd.f32 %v125, %v939
  %v943 = vxor.u32 %v942, 2147483648
  %v944 = vmul.f32 %v943, 1.442695
  %v945 = vpow.pop %v944
  %v946 = vadd.f32 %v945, 1.0
  %v947 = vrcp.pop %v946
  %v948 = vmul.f32 1.0, %v947
  %v949 = vtanh.pop %v942
  %v951 = vrot.slane %v752, 6
  %v953 = vmul.f32 %v948, %v951
  %955 = vrot.lane.b32.xlu0 %v949, 64
  %v956 = vpop.permute.xlu0 %955
  %v958 = vmul.f32 %v948, %v956
  %960 = vrot.lane.b32.xlu0 %v958, 32
  %v961 = vpop.permute.xlu0 %960
  %v963 = vadd.f32 %v953, %v961
  %v964 = vtanh.pop %v963
  %966 = vrot.lane.b32.xlu0 %v964, 64
  %v967 = vpop.permute.xlu0 %966
  %v969 = vmul.f32 %v948, %v967
  %970 = vrot.lane.b32.xlu0 %v758, 32
  %v971 = vpop.permute.xlu0 %970
  %v974 = vrot.slane %v865, 2
  %975 = vrot.lane.b32.xlu0 %v974, 64
  %v976 = vpop.permute.xlu0 %975
  %v978 = vsel %vm46, %v971, %v976
  %v980 = vrot.slane %v978, 6
  %v981 = vsel %vm340, %v980, 0
  %983 = vmatprep.subr.mxu0 0.0
  %984 = vmatpush1.msra.mxu0 0.0
  %985 = vmatprep.subr.mxu0 0.0
  %986 = vmatpush1.msra.mxu0 0.0
  %987 = vmatprep.subr.mxu0 0.0
  %988 = vmatpush1.msra.mxu0 0.0
  %989 = vmatprep.subr.mxu0 0.0
  %990 = vmatpush1.msra.mxu0 0.0
  %991 = vmatprep.subr.mxu0 0.0
  %992 = vmatpush1.msra.mxu0 0.0
  %993 = vmatprep.subr.mxu0 0.0
  %994 = vmatpush1.msra.mxu0 0.0
  %995 = vmatprep.subr.mxu0 0.0
  %996 = vmatpush1.msra.mxu0 0.0
  %997 = vmatprep.subr.mxu0 0.0
  %998 = vmatpush1.msra.mxu0 0.0
  %999 = vmatprep.subr.mxu0 0.0
  %1000 = vmatpush1.msra.mxu0 %v35
  %1001 = vmatprep.subr.mxu0 0.0
  %1002 = vmatpush1.msra.mxu0 %v34
  %1003 = vmatprep.subr.mxu0 0.0
  %1004 = vmatpush1.msra.mxu0 %v33
  %1005 = vmatprep.subr.mxu0 0.0
  %1006 = vmatpush1.msra.mxu0 %v32
  %1007 = vmatprep.subr.mxu0 0.0
  %1008 = vmatpush1.msra.mxu0 %v31
  %1009 = vmatprep.subr.mxu0 0.0
  %1010 = vmatpush1.msra.mxu0 %v30
  %1011 = vmatprep.subr.mxu0 0.0
  %1012 = vmatpush1.msra.mxu0 %v29
  %1013 = vmatprep.subr.mxu0 0.0
  %1014 = vmatpush1.msra.mxu0 %v28
  %1015 = vmatprep.subr.mxu0 0.0
  %1016 = vmatpush2.msra.mxu0 0.0
  %1017 = vmatprep.subr.mxu0 0.0
  %1018 = vmatpush2.msra.mxu0 0.0
  %1019 = vmatprep.subr.mxu0 0.0
  %1020 = vmatpush2.msra.mxu0 0.0
  %1021 = vmatprep.subr.mxu0 0.0
  %1022 = vmatpush2.msra.mxu0 0.0
  %1023 = vmatprep.subr.mxu0 0.0
  %1024 = vmatpush2.msra.mxu0 0.0
  %1025 = vmatprep.subr.mxu0 0.0
  %1026 = vmatpush2.msra.mxu0 0.0
  %1027 = vmatprep.subr.mxu0 0.0
  %1028 = vmatpush2.msra.mxu0 0.0
  %1029 = vmatprep.subr.mxu0 0.0
  %1030 = vmatpush2.msra.mxu0 0.0
  %1031 = vmatprep.subr.mxu0 0.0
  %1032 = vmatpush2.msra.mxu0 0.0
  %1033 = vmatprep.subr.mxu0 0.0
  %1034 = vmatpush2.msra.mxu0 0.0
  %1035 = vmatprep.subr.mxu0 0.0
  %1036 = vmatpush2.msra.mxu0 0.0
  %1037 = vmatprep.subr.mxu0 0.0
  %1038 = vmatpush2.msra.mxu0 0.0
  %1039 = vmatprep.subr.mxu0 0.0
  %1040 = vmatpush2.msra.mxu0 0.0
  %1041 = vmatprep.subr.mxu0 0.0
  %1042 = vmatpush2.msra.mxu0 0.0
  %1043 = vmatprep.subr.mxu0 0.0
  %1044 = vmatpush2.msra.mxu0 0.0
  %1045 = vmatprep.subr.mxu0 0.0
  %1046 = vmatpush2.msra.mxu0 0.0
  %1047 = vmatprep.mubr.f32.mxu0 0.0
  %1048 = vmatmul.mubr.f32.gmra.mxu0 %v981
  %v1049 = vpop.f32.mrf.mxu0
  %v1050 = vadd.f32 %v338, %v1049
  %v1051 = vpop.f32.mrf.mxu0
  %1052 = vdwg.mxu0
  %v1053 = vxor.u32 %v1050, 2147483648
  %v1054 = vmul.f32 %v1053, 1.442695
  %v1055 = vpow.pop %v1054
  %v1056 = vadd.f32 %v1055, 1.0
  %v1057 = vrcp.pop %v1056
  %v1058 = vmul.f32 1.0, %v1057
  %v1059 = vtanh.pop %v1050
  %v1060 = vmul.f32 %v1058, %v859
  %1062 = vrot.lane.b32.xlu0 %v1059, 64
  %v1063 = vpop.permute.xlu0 %1062
  %v1065 = vmul.f32 %v1058, %v1063
  %1067 = vrot.lane.b32.xlu0 %v1065, 32
  %v1068 = vpop.permute.xlu0 %1067
  %v1070 = vadd.f32 %v1060, %v1068
  %v1071 = vtanh.pop %v1070
  %1073 = vrot.lane.b32.xlu0 %v1071, 64
  %v1074 = vpop.permute.xlu0 %1073
  %v1076 = vmul.f32 %v1058, %v1074
  %1078 = vrot.lane.b32.xlu0 %v969, 32
  %v1079 = vpop.permute.xlu0 %1078
  %v1080 = vsel %vm46, %v1079, 0
  %1082 = vmatprep.subr.mxu0 0.0
  %1083 = vmatpush1.msra.mxu0 0.0
  %1084 = vmatprep.subr.mxu0 0.0
  %1085 = vmatpush1.msra.mxu0 0.0
  %1086 = vmatprep.subr.mxu0 0.0
  %1087 = vmatpush1.msra.mxu0 0.0
  %1088 = vmatprep.subr.mxu0 0.0
  %1089 = vmatpush1.msra.mxu0 0.0
  %1090 = vmatprep.subr.mxu0 0.0
  %1091 = vmatpush1.msra.mxu0 0.0
  %1092 = vmatprep.subr.mxu0 0.0
  %1093 = vmatpush1.msra.mxu0 0.0
  %1094 = vmatprep.subr.mxu0 0.0
  %1095 = vmatpush1.msra.mxu0 0.0
  %1096 = vmatprep.subr.mxu0 0.0
  %1097 = vmatpush1.msra.mxu0 0.0
  %1098 = vmatprep.subr.mxu0 0.0
  %1099 = vmatpush1.msra.mxu0 0.0
  %1100 = vmatprep.subr.mxu0 0.0
  %1101 = vmatpush1.msra.mxu0 0.0
  %1102 = vmatprep.subr.mxu0 0.0
  %1103 = vmatpush1.msra.mxu0 0.0
  %1104 = vmatprep.subr.mxu0 0.0
  %1105 = vmatpush1.msra.mxu0 0.0
  %1106 = vmatprep.subr.mxu0 0.0
  %1107 = vmatpush1.msra.mxu0 %v27
  %1108 = vmatprep.subr.mxu0 0.0
  %1109 = vmatpush1.msra.mxu0 %v26
  %1110 = vmatprep.subr.mxu0 0.0
  %1111 = vmatpush1.msra.mxu0 %v25
  %1112 = vmatprep.subr.mxu0 0.0
  %1113 = vmatpush1.msra.mxu0 %v24
  %1114 = vmatprep.subr.mxu0 0.0
  %1115 = vmatpush2.msra.mxu0 0.0
  %1116 = vmatprep.subr.mxu0 0.0
  %1117 = vmatpush2.msra.mxu0 0.0
  %1118 = vmatprep.subr.mxu0 0.0
  %1119 = vmatpush2.msra.mxu0 0.0
  %1120 = vmatprep.subr.mxu0 0.0
  %1121 = vmatpush2.msra.mxu0 0.0
  %1122 = vmatprep.subr.mxu0 0.0
  %1123 = vmatpush2.msra.mxu0 0.0
  %1124 = vmatprep.subr.mxu0 0.0
  %1125 = vmatpush2.msra.mxu0 0.0
  %1126 = vmatprep.subr.mxu0 0.0
  %1127 = vmatpush2.msra.mxu0 0.0
  %1128 = vmatprep.subr.mxu0 0.0
  %1129 = vmatpush2.msra.mxu0 0.0
  %1130 = vmatprep.subr.mxu0 0.0
  %1131 = vmatpush2.msra.mxu0 0.0
  %1132 = vmatprep.subr.mxu0 0.0
  %1133 = vmatpush2.msra.mxu0 0.0
  %1134 = vmatprep.subr.mxu0 0.0
  %1135 = vmatpush2.msra.mxu0 0.0
  %1136 = vmatprep.subr.mxu0 0.0
  %1137 = vmatpush2.msra.mxu0 0.0
  %1138 = vmatprep.subr.mxu0 0.0
  %1139 = vmatpush2.msra.mxu0 0.0
  %1140 = vmatprep.subr.mxu0 0.0
  %1141 = vmatpush2.msra.mxu0 0.0
  %1142 = vmatprep.subr.mxu0 0.0
  %1143 = vmatpush2.msra.mxu0 0.0
  %1144 = vmatprep.subr.mxu0 0.0
  %1145 = vmatpush2.msra.mxu0 0.0
  %1146 = vmatprep.mubr.f32.mxu0 0.0
  %1147 = vmatmul.mubr.f32.gmra.mxu0 %v1080
  %v1148 = vpop.f32.mrf.mxu0
  %v1149 = vadd.f32 0.0, %v1148
  %v1150 = vpop.f32.mrf.mxu0
  %1151 = vdwg.mxu0
  %v1153 = vrot.slane %v1149, 6
  %v1155 = vadd.f32 %v125, %v1153
  %v1156 = vxor.u32 %v1155, 2147483648
  %v1157 = vmul.f32 %v1156, 1.442695
  %v1158 = vpow.pop %v1157
  %v1159 = vadd.f32 %v1158, 1.0
  %v1160 = vrcp.pop %v1159
  %v1161 = vmul.f32 1.0, %v1160
  %v1162 = vtanh.pop %v1155
  %v1164 = vrot.slane %v963, 6
  %v1166 = vmul.f32 %v1161, %v1164
  %1168 = vrot.lane.b32.xlu0 %v1162, 64
  %v1169 = vpop.permute.xlu0 %1168
  %v1171 = vmul.f32 %v1161, %v1169
  %1173 = vrot.lane.b32.xlu0 %v1171, 32
  %v1174 = vpop.permute.xlu0 %1173
  %v1176 = vadd.f32 %v1166, %v1174
  %v1177 = vtanh.pop %v1176
  %1179 = vrot.lane.b32.xlu0 %v1177, 64
  %v1180 = vpop.permute.xlu0 %1179
  %v1182 = vmul.f32 %v1161, %v1180
  %1185 = vrot.lane.b32.xlu0 %v1076, 64
  %v1186 = vpop.permute.xlu0 %1185
  %v1188 = vsel %vm46, %v1079, %v1186
  %v1190 = vsel %vm340, %v1188, 0
  %1192 = vmatprep.subr.mxu0 0.0
  %1193 = vmatpush1.msra.mxu0 0.0
  %1194 = vmatprep.subr.mxu0 0.0
  %1195 = vmatpush1.msra.mxu0 0.0
  %1196 = vmatprep.subr.mxu0 0.0
  %1197 = vmatpush1.msra.mxu0 0.0
  %1198 = vmatprep.subr.mxu0 0.0
  %1199 = vmatpush1.msra.mxu0 0.0
  %1200 = vmatprep.subr.mxu0 0.0
  %1201 = vmatpush1.msra.mxu0 0.0
  %1202 = vmatprep.subr.mxu0 0.0
  %1203 = vmatpush1.msra.mxu0 0.0
  %1204 = vmatprep.subr.mxu0 0.0
  %1205 = vmatpush1.msra.mxu0 0.0
  %1206 = vmatprep.subr.mxu0 0.0
  %1207 = vmatpush1.msra.mxu0 0.0
  %1208 = vmatprep.subr.mxu0 0.0
  %1209 = vmatpush1.msra.mxu0 %v35
  %1210 = vmatprep.subr.mxu0 0.0
  %1211 = vmatpush1.msra.mxu0 %v34
  %1212 = vmatprep.subr.mxu0 0.0
  %1213 = vmatpush1.msra.mxu0 %v33
  %1214 = vmatprep.subr.mxu0 0.0
  %1215 = vmatpush1.msra.mxu0 %v32
  %1216 = vmatprep.subr.mxu0 0.0
  %1217 = vmatpush1.msra.mxu0 %v31
  %1218 = vmatprep.subr.mxu0 0.0
  %1219 = vmatpush1.msra.mxu0 %v30
  %1220 = vmatprep.subr.mxu0 0.0
  %1221 = vmatpush1.msra.mxu0 %v29
  %1222 = vmatprep.subr.mxu0 0.0
  %1223 = vmatpush1.msra.mxu0 %v28
  %1224 = vmatprep.subr.mxu0 0.0
  %1225 = vmatpush2.msra.mxu0 0.0
  %1226 = vmatprep.subr.mxu0 0.0
  %1227 = vmatpush2.msra.mxu0 0.0
  %1228 = vmatprep.subr.mxu0 0.0
  %1229 = vmatpush2.msra.mxu0 0.0
  %1230 = vmatprep.subr.mxu0 0.0
  %1231 = vmatpush2.msra.mxu0 0.0
  %1232 = vmatprep.subr.mxu0 0.0
  %1233 = vmatpush2.msra.mxu0 0.0
  %1234 = vmatprep.subr.mxu0 0.0
  %1235 = vmatpush2.msra.mxu0 0.0
  %1236 = vmatprep.subr.mxu0 0.0
  %1237 = vmatpush2.msra.mxu0 0.0
  %1238 = vmatprep.subr.mxu0 0.0
  %1239 = vmatpush2.msra.mxu0 0.0
  %1240 = vmatprep.subr.mxu0 0.0
  %1241 = vmatpush2.msra.mxu0 0.0
  %1242 = vmatprep.subr.mxu0 0.0
  %1243 = vmatpush2.msra.mxu0 0.0
  %1244 = vmatprep.subr.mxu0 0.0
  %1245 = vmatpush2.msra.mxu0 0.0
  %1246 = vmatprep.subr.mxu0 0.0
  %1247 = vmatpush2.msra.mxu0 0.0
  %1248 = vmatprep.subr.mxu0 0.0
  %1249 = vmatpush2.msra.mxu0 0.0
  %1250 = vmatprep.subr.mxu0 0.0
  %1251 = vmatpush2.msra.mxu0 0.0
  %1252 = vmatprep.subr.mxu0 0.0
  %1253 = vmatpush2.msra.mxu0 0.0
  %1254 = vmatprep.subr.mxu0 0.0
  %1255 = vmatpush2.msra.mxu0 0.0
  %1256 = vmatprep.mubr.f32.mxu0 0.0
  %1257 = vmatmul.mubr.f32.gmra.mxu0 %v1190
  %v1258 = vpop.f32.mrf.mxu0
  %v1259 = vadd.f32 %v338, %v1258
  %v1260 = vpop.f32.mrf.mxu0
  %1261 = vdwg.mxu0
  %v1262 = vxor.u32 %v1259, 2147483648
  %v1263 = vmul.f32 %v1262, 1.442695
  %v1264 = vpow.pop %v1263
  %v1265 = vadd.f32 %v1264, 1.0
  %v1266 = vrcp.pop %v1265
  %v1267 = vmul.f32 1.0, %v1266
  %v1268 = vtanh.pop %v1259
  %v1269 = vmul.f32 %v1267, %v1070
  %1271 = vrot.lane.b32.xlu0 %v1268, 64
  %v1272 = vpop.permute.xlu0 %1271
  %v1274 = vmul.f32 %v1267, %v1272
  %1276 = vrot.lane.b32.xlu0 %v1274, 32
  %v1277 = vpop.permute.xlu0 %1276
  %v1279 = vadd.f32 %v1269, %v1277
  %v1280 = vtanh.pop %v1279
  %1282 = vrot.lane.b32.xlu0 %v1280, 64
  %v1283 = vpop.permute.xlu0 %1282
  %v1285 = vmul.f32 %v1267, %v1283
  %v1287 = vrot.slane %v1182, 2
  %1288 = vrot.lane.b32.xlu0 %v1287, 32
  %v1289 = vpop.permute.xlu0 %1288
  %v1290 = vsel %vm46, %v1289, 0
  %1292 = vmatprep.subr.mxu0 0.0
  %1293 = vmatpush1.msra.mxu0 0.0
  %1294 = vmatprep.subr.mxu0 0.0
  %1295 = vmatpush1.msra.mxu0 0.0
  %1296 = vmatprep.subr.mxu0 0.0
  %1297 = vmatpush1.msra.mxu0 0.0
  %1298 = vmatprep.subr.mxu0 0.0
  %1299 = vmatpush1.msra.mxu0 0.0
  %1300 = vmatprep.subr.mxu0 0.0
  %1301 = vmatpush1.msra.mxu0 0.0
  %1302 = vmatprep.subr.mxu0 0.0
  %1303 = vmatpush1.msra.mxu0 0.0
  %1304 = vmatprep.subr.mxu0 0.0
  %1305 = vmatpush1.msra.mxu0 0.0
  %1306 = vmatprep.subr.mxu0 0.0
  %1307 = vmatpush1.msra.mxu0 0.0
  %1308 = vmatprep.subr.mxu0 0.0
  %1309 = vmatpush1.msra.mxu0 0.0
  %1310 = vmatprep.subr.mxu0 0.0
  %1311 = vmatpush1.msra.mxu0 0.0
  %1312 = vmatprep.subr.mxu0 0.0
  %1313 = vmatpush1.msra.mxu0 0.0
  %1314 = vmatprep.subr.mxu0 0.0
  %1315 = vmatpush1.msra.mxu0 0.0
  %1316 = vmatprep.subr.mxu0 0.0
  %1317 = vmatpush1.msra.mxu0 %v27
  %1318 = vmatprep.subr.mxu0 0.0
  %1319 = vmatpush1.msra.mxu0 %v26
  %1320 = vmatprep.subr.mxu0 0.0
  %1321 = vmatpush1.msra.mxu0 %v25
  %1322 = vmatprep.subr.mxu0 0.0
  %1323 = vmatpush1.msra.mxu0 %v24
  %1324 = vmatprep.subr.mxu0 0.0
  %1325 = vmatpush2.msra.mxu0 0.0
  %1326 = vmatprep.subr.mxu0 0.0
  %1327 = vmatpush2.msra.mxu0 0.0
  %1328 = vmatprep.subr.mxu0 0.0
  %1329 = vmatpush2.msra.mxu0 0.0
  %1330 = vmatprep.subr.mxu0 0.0
  %1331 = vmatpush2.msra.mxu0 0.0
  %1332 = vmatprep.subr.mxu0 0.0
  %1333 = vmatpush2.msra.mxu0 0.0
  %1334 = vmatprep.subr.mxu0 0.0
  %1335 = vmatpush2.msra.mxu0 0.0
  %1336 = vmatprep.subr.mxu0 0.0
  %1337 = vmatpush2.msra.mxu0 0.0
  %1338 = vmatprep.subr.mxu0 0.0
  %1339 = vmatpush2.msra.mxu0 0.0
  %1340 = vmatprep.subr.mxu0 0.0
  %1341 = vmatpush2.msra.mxu0 0.0
  %1342 = vmatprep.subr.mxu0 0.0
  %1343 = vmatpush2.msra.mxu0 0.0
  %1344 = vmatprep.subr.mxu0 0.0
  %1345 = vmatpush2.msra.mxu0 0.0
  %1346 = vmatprep.subr.mxu0 0.0
  %1347 = vmatpush2.msra.mxu0 0.0
  %1348 = vmatprep.subr.mxu0 0.0
  %1349 = vmatpush2.msra.mxu0 0.0
  %1350 = vmatprep.subr.mxu0 0.0
  %1351 = vmatpush2.msra.mxu0 0.0
  %1352 = vmatprep.subr.mxu0 0.0
  %1353 = vmatpush2.msra.mxu0 0.0
  %1354 = vmatprep.subr.mxu0 0.0
  %1355 = vmatpush2.msra.mxu0 0.0
  %1356 = vmatprep.mubr.f32.mxu0 0.0
  %1357 = vmatmul.mubr.f32.gmra.mxu0 %v1290
  %v1358 = vpop.f32.mrf.mxu0
  %v1359 = vadd.f32 0.0, %v1358
  %v1360 = vpop.f32.mrf.mxu0
  %1361 = vdwg.mxu0
  %v1363 = vrot.slane %v1359, 4
  %v1365 = vadd.f32 %v125, %v1363
  %v1366 = vxor.u32 %v1365, 2147483648
  %v1367 = vmul.f32 %v1366, 1.442695
  %v1368 = vpow.pop %v1367
  %v1369 = vadd.f32 %v1368, 1.0
  %v1370 = vrcp.pop %v1369
  %v1371 = vmul.f32 1.0, %v1370
  %v1372 = vtanh.pop %v1365
  %v1374 = vrot.slane %v1176, 6
  %v1376 = vmul.f32 %v1371, %v1374
  %1378 = vrot.lane.b32.xlu0 %v1372, 64
  %v1379 = vpop.permute.xlu0 %1378
  %v1381 = vmul.f32 %v1371, %v1379
  %1383 = vrot.lane.b32.xlu0 %v1381, 32
  %v1384 = vpop.permute.xlu0 %1383
  %v1386 = vadd.f32 %v1376, %v1384
  %v1387 = vtanh.pop %v1386
  %1389 = vrot.lane.b32.xlu0 %v1387, 64
  %v1390 = vpop.permute.xlu0 %1389
  %v1392 = vmul.f32 %v1371, %v1390
  %1393 = vrot.lane.b32.xlu0 %v1182, 32
  %v1394 = vpop.permute.xlu0 %1393
  %v1397 = vrot.slane %v1285, 6
  %1398 = vrot.lane.b32.xlu0 %v1397, 64
  %v1399 = vpop.permute.xlu0 %1398
  %v1401 = vsel %vm46, %v1394, %v1399
  %v1403 = vrot.slane %v1401, 2
  %v1404 = vsel %vm340, %v1403, 0
  %1406 = vmatprep.subr.mxu0 0.0
  %1407 = vmatpush1.msra.mxu0 0.0
  %1408 = vmatprep.subr.mxu0 0.0
  %1409 = vmatpush1.msra.mxu0 0.0
  %1410 = vmatprep.subr.mxu0 0.0
  %1411 = vmatpush1.msra.mxu0 0.0
  %1412 = vmatprep.subr.mxu0 0.0
  %1413 = vmatpush1.msra.mxu0 0.0
  %1414 = vmatprep.subr.mxu0 0.0
  %1415 = vmatpush1.msra.mxu0 0.0
  %1416 = vmatprep.subr.mxu0 0.0
  %1417 = vmatpush1.msra.mxu0 0.0
  %1418 = vmatprep.subr.mxu0 0.0
  %1419 = vmatpush1.msra.mxu0 0.0
  %1420 = vmatprep.subr.mxu0 0.0
  %1421 = vmatpush1.msra.mxu0 0.0
  %1422 = vmatprep.subr.mxu0 0.0
  %1423 = vmatpush1.msra.mxu0 %v35
  %1424 = vmatprep.subr.mxu0 0.0
  %1425 = vmatpush1.msra.mxu0 %v34
  %1426 = vmatprep.subr.mxu0 0.0
  %1427 = vmatpush1.msra.mxu0 %v33
  %1428 = vmatprep.subr.mxu0 0.0
  %1429 = vmatpush1.msra.mxu0 %v32
  %1430 = vmatprep.subr.mxu0 0.0
  %1431 = vmatpush1.msra.mxu0 %v31
  %1432 = vmatprep.subr.mxu0 0.0
  %1433 = vmatpush1.msra.mxu0 %v30
  %1434 = vmatprep.subr.mxu0 0.0
  %1435 = vmatpush1.msra.mxu0 %v29
  %1436 = vmatprep.subr.mxu0 0.0
  %1437 = vmatpush1.msra.mxu0 %v28
  %1438 = vmatprep.subr.mxu0 0.0
  %1439 = vmatpush2.msra.mxu0 0.0
  %1440 = vmatprep.subr.mxu0 0.0
  %1441 = vmatpush2.msra.mxu0 0.0
  %1442 = vmatprep.subr.mxu0 0.0
  %1443 = vmatpush2.msra.mxu0 0.0
  %1444 = vmatprep.subr.mxu0 0.0
  %1445 = vmatpush2.msra.mxu0 0.0
  %1446 = vmatprep.subr.mxu0 0.0
  %1447 = vmatpush2.msra.mxu0 0.0
  %1448 = vmatprep.subr.mxu0 0.0
  %1449 = vmatpush2.msra.mxu0 0.0
  %1450 = vmatprep.subr.mxu0 0.0
  %1451 = vmatpush2.msra.mxu0 0.0
  %1452 = vmatprep.subr.mxu0 0.0
  %1453 = vmatpush2.msra.mxu0 0.0
  %1454 = vmatprep.subr.mxu0 0.0
  %1455 = vmatpush2.msra.mxu0 0.0
  %1456 = vmatprep.subr.mxu0 0.0
  %1457 = vmatpush2.msra.mxu0 0.0
  %1458 = vmatprep.subr.mxu0 0.0
  %1459 = vmatpush2.msra.mxu0 0.0
  %1460 = vmatprep.subr.mxu0 0.0
  %1461 = vmatpush2.msra.mxu0 0.0
  %1462 = vmatprep.subr.mxu0 0.0
  %1463 = vmatpush2.msra.mxu0 0.0
  %1464 = vmatprep.subr.mxu0 0.0
  %1465 = vmatpush2.msra.mxu0 0.0
  %1466 = vmatprep.subr.mxu0 0.0
  %1467 = vmatpush2.msra.mxu0 0.0
  %1468 = vmatprep.subr.mxu0 0.0
  %1469 = vmatpush2.msra.mxu0 0.0
  %1470 = vmatprep.mubr.f32.mxu0 0.0
  %1471 = vmatmul.mubr.f32.gmra.mxu0 %v1404
  %v1472 = vpop.f32.mrf.mxu0
  %v1473 = vadd.f32 %v338, %v1472
  %v1474 = vpop.f32.mrf.mxu0
  %1475 = vdwg.mxu0
  %v1476 = vxor.u32 %v1473, 2147483648
  %v1477 = vmul.f32 %v1476, 1.442695
  %v1478 = vpow.pop %v1477
  %v1479 = vadd.f32 %v1478, 1.0
  %v1480 = vrcp.pop %v1479
  %v1481 = vmul.f32 1.0, %v1480
  %v1482 = vtanh.pop %v1473
  %v1483 = vmul.f32 %v1481, %v1279
  %1485 = vrot.lane.b32.xlu0 %v1482, 64
  %v1486 = vpop.permute.xlu0 %1485
  %v1488 = vmul.f32 %v1481, %v1486
  %1490 = vrot.lane.b32.xlu0 %v1488, 32
  %v1491 = vpop.permute.xlu0 %1490
  %v1493 = vadd.f32 %v1483, %v1491
  %v1494 = vtanh.pop %v1493
  %1496 = vrot.lane.b32.xlu0 %v1494, 64
  %v1497 = vpop.permute.xlu0 %1496
  %v1499 = vmul.f32 %v1481, %v1497
  %v1501 = vrot.slane %v1392, 4
  %1502 = vrot.lane.b32.xlu0 %v1501, 32
  %v1503 = vpop.permute.xlu0 %1502
  %v1504 = vsel %vm46, %v1503, 0
  %1506 = vmatprep.subr.mxu0 0.0
  %1507 = vmatpush1.msra.mxu0 0.0
  %1508 = vmatprep.subr.mxu0 0.0
  %1509 = vmatpush1.msra.mxu0 0.0
  %1510 = vmatprep.subr.mxu0 0.0
  %1511 = vmatpush1.msra.mxu0 0.0
  %1512 = vmatprep.subr.mxu0 0.0
  %1513 = vmatpush1.msra.mxu0 0.0
  %1514 = vmatprep.subr.mxu0 0.0
  %1515 = vmatpush1.msra.mxu0 0.0
  %1516 = vmatprep.subr.mxu0 0.0
  %1517 = vmatpush1.msra.mxu0 0.0
  %1518 = vmatprep.subr.mxu0 0.0
  %1519 = vmatpush1.msra.mxu0 0.0
  %1520 = vmatprep.subr.mxu0 0.0
  %1521 = vmatpush1.msra.mxu0 0.0
  %1522 = vmatprep.subr.mxu0 0.0
  %1523 = vmatpush1.msra.mxu0 0.0
  %1524 = vmatprep.subr.mxu0 0.0
  %1525 = vmatpush1.msra.mxu0 0.0
  %1526 = vmatprep.subr.mxu0 0.0
  %1527 = vmatpush1.msra.mxu0 0.0
  %1528 = vmatprep.subr.mxu0 0.0
  %1529 = vmatpush1.msra.mxu0 0.0
  %1530 = vmatprep.subr.mxu0 0.0
  %1531 = vmatpush1.msra.mxu0 %v27
  %1532 = vmatprep.subr.mxu0 0.0
  %1533 = vmatpush1.msra.mxu0 %v26
  %1534 = vmatprep.subr.mxu0 0.0
  %1535 = vmatpush1.msra.mxu0 %v25
  %1536 = vmatprep.subr.mxu0 0.0
  %1537 = vmatpush1.msra.mxu0 %v24
  %1538 = vmatprep.subr.mxu0 0.0
  %1539 = vmatpush2.msra.mxu0 0.0
  %1540 = vmatprep.subr.mxu0 0.0
  %1541 = vmatpush2.msra.mxu0 0.0
  %1542 = vmatprep.subr.mxu0 0.0
  %1543 = vmatpush2.msra.mxu0 0.0
  %1544 = vmatprep.subr.mxu0 0.0
  %1545 = vmatpush2.msra.mxu0 0.0
  %1546 = vmatprep.subr.mxu0 0.0
  %1547 = vmatpush2.msra.mxu0 0.0
  %1548 = vmatprep.subr.mxu0 0.0
  %1549 = vmatpush2.msra.mxu0 0.0
  %1550 = vmatprep.subr.mxu0 0.0
  %1551 = vmatpush2.msra.mxu0 0.0
  %1552 = vmatprep.subr.mxu0 0.0
  %1553 = vmatpush2.msra.mxu0 0.0
  %1554 = vmatprep.subr.mxu0 0.0
  %1555 = vmatpush2.msra.mxu0 0.0
  %1556 = vmatprep.subr.mxu0 0.0
  %1557 = vmatpush2.msra.mxu0 0.0
  %1558 = vmatprep.subr.mxu0 0.0
  %1559 = vmatpush2.msra.mxu0 0.0
  %1560 = vmatprep.subr.mxu0 0.0
  %1561 = vmatpush2.msra.mxu0 0.0
  %1562 = vmatprep.subr.mxu0 0.0
  %1563 = vmatpush2.msra.mxu0 0.0
  %1564 = vmatprep.subr.mxu0 0.0
  %1565 = vmatpush2.msra.mxu0 0.0
  %1566 = vmatprep.subr.mxu0 0.0
  %1567 = vmatpush2.msra.mxu0 0.0
  %1568 = vmatprep.subr.mxu0 0.0
  %1569 = vmatpush2.msra.mxu0 0.0
  %1570 = vmatprep.mubr.f32.mxu0 0.0
  %1571 = vmatmul.mubr.f32.gmra.mxu0 %v1504
  %v1572 = vpop.f32.mrf.mxu0
  %v1573 = vadd.f32 0.0, %v1572
  %v1574 = vpop.f32.mrf.mxu0
  %1575 = vdwg.mxu0
  %v1577 = vrot.slane %v1573, 2
  %v1579 = vadd.f32 %v125, %v1577
  %v1580 = vxor.u32 %v1579, 2147483648
  %v1581 = vmul.f32 %v1580, 1.442695
  %v1582 = vpow.pop %v1581
  %v1583 = vadd.f32 %v1582, 1.0
  %v1584 = vrcp.pop %v1583
  %v1585 = vmul.f32 1.0, %v1584
  %v1586 = vtanh.pop %v1579
  %v1588 = vrot.slane %v1386, 6
  %v1590 = vmul.f32 %v1585, %v1588
  %1592 = vrot.lane.b32.xlu0 %v1586, 64
  %v1593 = vpop.permute.xlu0 %1592
  %v1595 = vmul.f32 %v1585, %v1593
  %1597 = vrot.lane.b32.xlu0 %v1595, 32
  %v1598 = vpop.permute.xlu0 %1597
  %v1600 = vadd.f32 %v1590, %v1598
  %v1601 = vtanh.pop %v1600
  %1603 = vrot.lane.b32.xlu0 %v1601, 64
  %v1604 = vpop.permute.xlu0 %1603
  %v1606 = vmul.f32 %v1585, %v1604
  %1607 = vrot.lane.b32.xlu0 %v1392, 32
  %v1608 = vpop.permute.xlu0 %1607
  %v1611 = vrot.slane %v1499, 4
  %1612 = vrot.lane.b32.xlu0 %v1611, 64
  %v1613 = vpop.permute.xlu0 %1612
  %v1615 = vsel %vm46, %v1608, %v1613
  %v1617 = vrot.slane %v1615, 4
  %v1618 = vsel %vm340, %v1617, 0
  %1620 = vmatprep.subr.mxu0 0.0
  %1621 = vmatpush1.msra.mxu0 0.0
  %1622 = vmatprep.subr.mxu0 0.0
  %1623 = vmatpush1.msra.mxu0 0.0
  %1624 = vmatprep.subr.mxu0 0.0
  %1625 = vmatpush1.msra.mxu0 0.0
  %1626 = vmatprep.subr.mxu0 0.0
  %1627 = vmatpush1.msra.mxu0 0.0
  %1628 = vmatprep.subr.mxu0 0.0
  %1629 = vmatpush1.msra.mxu0 0.0
  %1630 = vmatprep.subr.mxu0 0.0
  %1631 = vmatpush1.msra.mxu0 0.0
  %1632 = vmatprep.subr.mxu0 0.0
  %1633 = vmatpush1.msra.mxu0 0.0
  %1634 = vmatprep.subr.mxu0 0.0
  %1635 = vmatpush1.msra.mxu0 0.0
  %1636 = vmatprep.subr.mxu0 0.0
  %1637 = vmatpush1.msra.mxu0 %v35
  %1638 = vmatprep.subr.mxu0 0.0
  %1639 = vmatpush1.msra.mxu0 %v34
  %1640 = vmatprep.subr.mxu0 0.0
  %1641 = vmatpush1.msra.mxu0 %v33
  %1642 = vmatprep.subr.mxu0 0.0
  %1643 = vmatpush1.msra.mxu0 %v32
  %1644 = vmatprep.subr.mxu0 0.0
  %1645 = vmatpush1.msra.mxu0 %v31
  %1646 = vmatprep.subr.mxu0 0.0
  %1647 = vmatpush1.msra.mxu0 %v30
  %1648 = vmatprep.subr.mxu0 0.0
  %1649 = vmatpush1.msra.mxu0 %v29
  %1650 = vmatprep.subr.mxu0 0.0
  %1651 = vmatpush1.msra.mxu0 %v28
  %1652 = vmatprep.subr.mxu0 0.0
  %1653 = vmatpush2.msra.mxu0 0.0
  %1654 = vmatprep.subr.mxu0 0.0
  %1655 = vmatpush2.msra.mxu0 0.0
  %1656 = vmatprep.subr.mxu0 0.0
  %1657 = vmatpush2.msra.mxu0 0.0
  %1658 = vmatprep.subr.mxu0 0.0
  %1659 = vmatpush2.msra.mxu0 0.0
  %1660 = vmatprep.subr.mxu0 0.0
  %1661 = vmatpush2.msra.mxu0 0.0
  %1662 = vmatprep.subr.mxu0 0.0
  %1663 = vmatpush2.msra.mxu0 0.0
  %1664 = vmatprep.subr.mxu0 0.0
  %1665 = vmatpush2.msra.mxu0 0.0
  %1666 = vmatprep.subr.mxu0 0.0
  %1667 = vmatpush2.msra.mxu0 0.0
  %1668 = vmatprep.subr.mxu0 0.0
  %1669 = vmatpush2.msra.mxu0 0.0
  %1670 = vmatprep.subr.mxu0 0.0
  %1671 = vmatpush2.msra.mxu0 0.0
  %1672 = vmatprep.subr.mxu0 0.0
  %1673 = vmatpush2.msra.mxu0 0.0
  %1674 = vmatprep.subr.mxu0 0.0
  %1675 = vmatpush2.msra.mxu0 0.0
  %1676 = vmatprep.subr.mxu0 0.0
  %1677 = vmatpush2.msra.mxu0 0.0
  %1678 = vmatprep.subr.mxu0 0.0
  %1679 = vmatpush2.msra.mxu0 0.0
  %1680 = vmatprep.subr.mxu0 0.0
  %1681 = vmatpush2.msra.mxu0 0.0
  %1682 = vmatprep.subr.mxu0 0.0
  %1683 = vmatpush2.msra.mxu0 0.0
  %1684 = vmatprep.mubr.f32.mxu0 0.0
  %1685 = vmatmul.mubr.f32.gmra.mxu0 %v1618
  %v1686 = vpop.f32.mrf.mxu0
  %v1687 = vadd.f32 %v338, %v1686
  %v1688 = vpop.f32.mrf.mxu0
  %1689 = vdwg.mxu0
  %v1690 = vxor.u32 %v1687, 2147483648
  %v1691 = vmul.f32 %v1690, 1.442695
  %v1692 = vpow.pop %v1691
  %v1693 = vadd.f32 %v1692, 1.0
  %v1694 = vrcp.pop %v1693
  %v1695 = vmul.f32 1.0, %v1694
  %v1696 = vtanh.pop %v1687
  %v1697 = vmul.f32 %v1695, %v1493
  %1699 = vrot.lane.b32.xlu0 %v1696, 64
  %v1700 = vpop.permute.xlu0 %1699
  %v1702 = vmul.f32 %v1695, %v1700
  %1704 = vrot.lane.b32.xlu0 %v1702, 32
  %v1705 = vpop.permute.xlu0 %1704
  %v1707 = vadd.f32 %v1697, %v1705
  %v1708 = vtanh.pop %v1707
  %1710 = vrot.lane.b32.xlu0 %v1708, 64
  %v1711 = vpop.permute.xlu0 %1710
  %v1713 = vmul.f32 %v1695, %v1711
  %1715 = vrot.lane.b32.xlu0 %v1606, 32
  %v1716 = vpop.permute.xlu0 %1715
  %v1719 = vrot.slane %v1713, 2
  %1720 = vrot.lane.b32.xlu0 %v1719, 64
  %v1721 = vpop.permute.xlu0 %1720
  %v1723 = vsel %vm46, %v1716, %v1721
  %v1725 = vrot.slane %v1723, 6
  %v1726 = vsel %vm340, %v1725, 0
  %1728 = vmatprep.subr.mxu0 0.0
  %1729 = vmatpush1.msra.mxu0 0.0
  %1730 = vmatprep.subr.mxu0 0.0
  %1731 = vmatpush1.msra.mxu0 0.0
  %1732 = vmatprep.subr.mxu0 0.0
  %1733 = vmatpush1.msra.mxu0 0.0
  %1734 = vmatprep.subr.mxu0 0.0
  %1735 = vmatpush1.msra.mxu0 0.0
  %1736 = vmatprep.subr.mxu0 0.0
  %1737 = vmatpush1.msra.mxu0 0.0
  %1738 = vmatprep.subr.mxu0 0.0
  %1739 = vmatpush1.msra.mxu0 0.0
  %1740 = vmatprep.subr.mxu0 0.0
  %1741 = vmatpush1.msra.mxu0 0.0
  %1742 = vmatprep.subr.mxu0 0.0
  %1743 = vmatpush1.msra.mxu0 0.0
  %1744 = vmatprep.subr.mxu0 0.0
  %1745 = vmatpush1.msra.mxu0 %v35
  %1746 = vmatprep.subr.mxu0 0.0
  %1747 = vmatpush1.msra.mxu0 %v34
  %1748 = vmatprep.subr.mxu0 0.0
  %1749 = vmatpush1.msra.mxu0 %v33
  %1750 = vmatprep.subr.mxu0 0.0
  %1751 = vmatpush1.msra.mxu0 %v32
  %1752 = vmatprep.subr.mxu0 0.0
  %1753 = vmatpush1.msra.mxu0 %v31
  %1754 = vmatprep.subr.mxu0 0.0
  %1755 = vmatpush1.msra.mxu0 %v30
  %1756 = vmatprep.subr.mxu0 0.0
  %1757 = vmatpush1.msra.mxu0 %v29
  %1758 = vmatprep.subr.mxu0 0.0
  %1759 = vmatpush1.msra.mxu0 %v28
  %1760 = vmatprep.subr.mxu0 0.0
  %1761 = vmatpush2.msra.mxu0 0.0
  %1762 = vmatprep.subr.mxu0 0.0
  %1763 = vmatpush2.msra.mxu0 0.0
  %1764 = vmatprep.subr.mxu0 0.0
  %1765 = vmatpush2.msra.mxu0 0.0
  %1766 = vmatprep.subr.mxu0 0.0
  %1767 = vmatpush2.msra.mxu0 0.0
  %1768 = vmatprep.subr.mxu0 0.0
  %1769 = vmatpush2.msra.mxu0 0.0
  %1770 = vmatprep.subr.mxu0 0.0
  %1771 = vmatpush2.msra.mxu0 0.0
  %1772 = vmatprep.subr.mxu0 0.0
  %1773 = vmatpush2.msra.mxu0 0.0
  %1774 = vmatprep.subr.mxu0 0.0
  %1775 = vmatpush2.msra.mxu0 0.0
  %1776 = vmatprep.subr.mxu0 0.0
  %1777 = vmatpush2.msra.mxu0 0.0
  %1778 = vmatprep.subr.mxu0 0.0
  %1779 = vmatpush2.msra.mxu0 0.0
  %1780 = vmatprep.subr.mxu0 0.0
  %1781 = vmatpush2.msra.mxu0 0.0
  %1782 = vmatprep.subr.mxu0 0.0
  %1783 = vmatpush2.msra.mxu0 0.0
  %1784 = vmatprep.subr.mxu0 0.0
  %1785 = vmatpush2.msra.mxu0 0.0
  %1786 = vmatprep.subr.mxu0 0.0
  %1787 = vmatpush2.msra.mxu0 0.0
  %1788 = vmatprep.subr.mxu0 0.0
  %1789 = vmatpush2.msra.mxu0 0.0
  %1790 = vmatprep.subr.mxu0 0.0
  %1791 = vmatpush2.msra.mxu0 0.0
  %1792 = vmatprep.mubr.f32.mxu0 0.0
  %1793 = vmatmul.mubr.f32.gmra.mxu0 %v1726
  %v1794 = vpop.f32.mrf.mxu0
  %v1795 = vadd.f32 %v338, %v1794
  %v1796 = vpop.f32.mrf.mxu0
  %1797 = vdwg.mxu0
  %v1798 = vxor.u32 %v1795, 2147483648
  %v1799 = vmul.f32 %v1798, 1.442695
  %v1800 = vpow.pop %v1799
  %v1801 = vadd.f32 %v1800, 1.0
  %v1802 = vrcp.pop %v1801
  %v1803 = vmul.f32 1.0, %v1802
  %v1804 = vtanh.pop %v1795
  %v1805 = vmul.f32 %v1803, %v1707
  %1807 = vrot.lane.b32.xlu0 %v1804, 64
  %v1808 = vpop.permute.xlu0 %1807
  %v1810 = vmul.f32 %v1803, %v1808
  %1812 = vrot.lane.b32.xlu0 %v1810, 32
  %v1813 = vpop.permute.xlu0 %1812
  %v1815 = vadd.f32 %v1805, %v1813
  %v1816 = vtanh.pop %v1815
  %1818 = vrot.lane.b32.xlu0 %v1816, 64
  %v1819 = vpop.permute.xlu0 %1818
  %v1821 = vmul.f32 %v1803, %v1819
  %v1823 = vrot.slane %v1821, 2
  %1824 = vrot.lane.b32.xlu0 %v1823, 64
  %v1825 = vpop.permute.xlu0 %1824
  %1828 = vrot.lane.b32.xlu0 %v1600, 32
  %v1829 = vpop.permute.xlu0 %1828
  %v1832 = vrot.slane %v1815, 2
  %1833 = vrot.lane.b32.xlu0 %v1832, 64
  %v1834 = vpop.permute.xlu0 %1833
  %v1836 = vsel %vm46, %v1716, %v1825
  %v1837 = vsel %vm340, %v1836, %v1829
  %vm1838 = vcmask 785408
  %v1839 = vsel %vm1838, %v1837, %v1834
  %1840 = vst [vmem:[%s5 - $0x6] sm:$0xc0] %v1839
  // Predicated region
  $region22: #{encoder_forward.1} parent=0 // pred_check
    _
  $region23: #{encoder_forward.1} parent=0 // pred_check_branch
    %1842 = sbr.rel (0) target = $region25
  $region24: #{encoder_forward.1} parent=0 // pred_region
    _
  $region25: #{encoder_forward.1} parent=0 // pred_fallthru
    _
  // Predicated region
  $region26: #{encoder_forward.1} parent=0 // pred_check
    _
  $region27: #{encoder_forward.1} parent=0 // pred_check_branch
    %1844 = sbr.rel (0) target = $region29
  $region28: #{encoder_forward.1} parent=0 // pred_region
    _
  $region29: #{encoder_forward.1} parent=0 // pred_fallthru
    _

</llo_original>
